<compile_context>
chip_gen: v5e
topology: v5e:2x2
jax: 0.10.0
libtpu: 0.0.40
codegen_flags: <defaults>
</compile_context>

<pallas_src>
import functools

import jax
import jax.numpy as jnp
from jax.experimental import pallas as pl
from jax.experimental.pallas import tpu as pltpu


def _round_up(x, m):
    return (x + m - 1) // m * m


def _pick_batch_block(n, per_sample_bytes, budget_bytes=8 << 20):
    """Largest divisor of n that keeps the grid >= 2 (megacore) and fits budget."""
    best = 1
    for b in range(1, n + 1):
        if n % b != 0:
            continue
        if n >= 2 and n // b < 2:
            continue
        if b * per_sample_bytes > budget_bytes:
            continue
        best = b
    return best


def _conv_stack_kernel(*refs, dims, K, W, Wp, HWp, FLAT, ROWW, lead, B_blk,
                       use_relu):
    """Fused conv stack for one block of B_blk batch elements.

    refs layout:
      refs[0]              : x block   (B_blk, Cin, FLAT)   bf16, zero-padded flat
      refs[1 : 1+L]        : weights   (K, Cout_l, K*Cin_l) bf16, kx-major blocks
      refs[1+L]            : out block (B_blk, Cout, H*Wp)  padded-column grid
      refs[2+L], refs[3+L] : activation ping/pong scratch (hid, FLAT) bf16
      refs[4+L]            : ky-staging scratch (K*max_cin, ROWW_pad) bf16
    """
    n_layers = len(dims) - 1
    x_ref = refs[0]
    w_refs = refs[1:1 + n_layers]
    o_ref = refs[1 + n_layers]
    act_a, act_b, rows_ref = refs[2 + n_layers:5 + n_layers]
    bufs = (act_a, act_b)

    p = (K - 1) // 2
    dst = lead + p * Wp + p          # 128-aligned interior offset (item 4)

    # (2) Border-only zeroing: the interior [dst, dst+HWp) is fully rewritten
    # every layer (wrap columns masked), so only the padding border needs
    # zeros.  Done every grid step (each megacore TC has its own scratch).
    if n_layers > 1:
        zpre = jnp.zeros((act_a.shape[0], dst), act_a.dtype)
        zpost = jnp.zeros((act_a.shape[0], FLAT - dst - HWp), act_a.dtype)
        for buf in bufs:
            buf[:, 0:dst] = zpre
            buf[:, dst + HWp:FLAT] = zpost

    # Valid-column mask on the (H, Wp) padded-column grid: columns j >= W are
    # "wrapped window" garbage; they are zeroed before the inter-layer
    # writeback (landing exactly on the next buffer's zero padding).
    col = jax.lax.broadcasted_iota(jnp.int32, (1, HWp), 1)
    valid = (col % Wp) < W

    for b in range(B_blk):
        x_val = x_ref[b]                                   # (Cin, FLAT) bf16
        for layer in range(n_layers):
            cin, cout = dims[layer], dims[layer + 1]

            # (7) Stage K row-shifted slices (one per ky); tap (ky, kx) of the
            # flat padded image is the contiguous slice starting at ky*Wp + kx.
            for ky in range(K):
                a0 = lead + ky * Wp
                if layer == 0:
                    blk = x_val[:, a0:a0 + ROWW]
                else:
                    blk = bufs[(layer - 1) % 2][0:cin, a0:a0 + ROWW]   # (5)
                rows_ref[ky * cin:(ky + 1) * cin, 0:ROWW] = blk

            # K MXU matmuls over kx on lane-shifted views, f32 accumulation.
            acc = jnp.zeros((cout, HWp), jnp.float32)
            for kx in range(K):
                wk = w_refs[layer][kx]                     # (cout, K*cin) bf16
                op = rows_ref[0:K * cin, kx:kx + HWp]      # (K*cin, HWp) bf16
                acc = acc + jnp.dot(wk, op, preferred_element_type=jnp.float32)

            if use_relu and layer < n_layers - 1:
                acc = jnp.where(acc >= 0, acc, 0.2 * acc)  # LeakyReLU(0.2)

            if layer == n_layers - 1:
                # Lane-dense store on the padded-column grid; wrapper crops.
                o_ref[b] = acc.astype(o_ref.dtype)
            else:
                nxt = jnp.where(valid, acc, 0.0).astype(act_a.dtype)
                bufs[layer % 2][0:cout, dst:dst + HWp] = nxt   # aligned (4)


def conv_stack_forward(x_nchw, weights, use_relu=False):
    """Matches ConvStack.forward: NCHW in, NCHW out. Single fused Pallas call."""
    N, Cin, H, W = x_nchw.shape
    K = weights[0].shape[0]
    p = (K - 1) // 2
    Hp, Wp = H + 2 * p, W + 2 * p
    HWp = H * Wp

    # (4) Prepend `lead` zero lanes so the interior offset is 128-aligned.
    base = p * Wp + p
    lead = (-base) % 128
    FLAT = _round_up(lead + Hp * Wp + K, 128)
    ROWW = HWp + K - 1                      # staged row width (covers all kx)
    ROWWP = _round_up(ROWW, 128)

    dims = [w.shape[2] for w in weights] + [weights[-1].shape[3]]
    assert dims[0] == Cin
    n_layers = len(weights)
    out_dim = dims[-1]
    hid = max(dims[1:-1]) if n_layers > 1 else out_dim
    max_cin = max(dims[:-1])
    out_itemsize = jnp.dtype(x_nchw.dtype).itemsize

    # (3) Multi-sample grid steps; keep grid >= 2 for megacore.
    per_sample = 2 * Cin * FLAT * 2 + 2 * out_dim * HWp * out_itemsize
    B_blk = _pick_batch_block(N, per_sample)
    grid = (N // B_blk,)

    # (1) bf16 data path: pad+flatten the network input once on the host
    # (intermediates are padded implicitly by the VMEM border zeros).
    xp = jnp.pad(x_nchw, ((0, 0), (0, 0), (p, p), (p, p)))
    xf = xp.reshape(N, Cin, Hp * Wp).astype(jnp.bfloat16)
    xf = jnp.pad(xf, ((0, 0), (0, 0), (lead, FLAT - lead - Hp * Wp)))

    # (7) Weights as K kx-major blocks: wmat[kx, o, ky*cin + c] = w[ky, kx, c, o].
    wmats = [
        jnp.transpose(w, (1, 3, 0, 2)).reshape(
            K, w.shape[3], K * w.shape[2]).astype(jnp.bfloat16)
        for w in weights
    ]

    kernel = functools.partial(
        _conv_stack_kernel, dims=tuple(dims), K=K, W=W, Wp=Wp, HWp=HWp,
        FLAT=FLAT, ROWW=ROWW, lead=lead, B_blk=B_blk, use_relu=use_relu)

    in_specs = [pl.BlockSpec((B_blk, Cin, FLAT), lambda g: (g, 0, 0))]
    for wm in wmats:
        # Constant index map -> weights stay VMEM-resident across the grid.
        in_specs.append(pl.BlockSpec(wm.shape, lambda g: (0, 0, 0)))

    scratch_shapes = [
        pltpu.VMEM((hid, FLAT), jnp.bfloat16),            # act ping
        pltpu.VMEM((hid, FLAT), jnp.bfloat16),            # act pong
        pltpu.VMEM((K * max_cin, ROWWP), jnp.bfloat16),   # ky-staging rows
    ]

    # (9/10) Explicit VMEM budget: double-buffered input/output blocks,
    # double-buffered weights, plus scratch, with headroom.
    need = (2 * B_blk * Cin * FLAT * 2
            + 2 * B_blk * out_dim * HWp * out_itemsize
            + 2 * sum(int(wm.size) * 2 for wm in wmats)
            + 2 * hid * FLAT * 2 + K * max_cin * ROWWP * 2)
    vmem_limit = int(min(64 << 20, max(32 << 20, 2 * need + (4 << 20))))

    out_pad = pl.pallas_call(
        kernel,
        out_shape=jax.ShapeDtypeStruct((N, out_dim, HWp), x_nchw.dtype),
        grid_spec=pltpu.PrefetchScalarGridSpec(
            num_scalar_prefetch=0,
            grid=grid,
            in_specs=in_specs,
            out_specs=pl.BlockSpec((B_blk, out_dim, HWp), lambda g: (g, 0, 0)),
            scratch_shapes=scratch_shapes),
        compiler_params=pltpu.CompilerParams(
            dimension_semantics=("parallel",),
            vmem_limit_bytes=vmem_limit),
    )(xf, *wmats)

    # Drop the K-1 padded columns per row: (N, Cout, H*Wp) -> (N, Cout, H, W).
    return out_pad.reshape(N, out_dim, H, Wp)[:, :, :, :W]


def init_conv_stack_params(key, in_dim, out_dim, hid_dim=None, kernel_size=5,
                           layer_num=3):
    """Deterministic synthetic weights, shapes matching nn.Conv2d (bias=False).

    Returned weights are in (K, K, Cin, Cout) layout."""
    assert kernel_size in [3, 5, 7]
    if hid_dim is None:
        hid_dim = out_dim
    dims = [in_dim] + [hid_dim] * (layer_num - 1) + [out_dim]
    weights = []
    for i in range(layer_num):
        key, sub = jax.random.split(key)
        cin, cout = dims[i], dims[i + 1]
        fan_in = cin * kernel_size * kernel_size
        bound = 1.0 / (fan_in ** 0.5)
        w = jax.random.uniform(
            sub, (kernel_size, kernel_size, cin, cout),
            dtype=jnp.float32, minval=-bound, maxval=bound,
        )
        weights.append(w)
    return weights


def _reference_forward(x_nchw, weights, use_relu=False):
    """Pure-JAX reference using lax.conv (f32) for correctness checking."""
    x = x_nchw
    n_layers = len(weights)
    for i, w in enumerate(weights):
        w_oihw = jnp.transpose(w, (3, 2, 0, 1))
        K = w.shape[0]
        p = (K - 1) // 2
        x = jax.lax.conv_general_dilated(
            x, w_oihw, window_strides=(1, 1), padding=[(p, p), (p, p)],
            dimension_numbers=("NCHW", "OIHW", "NCHW"),
        )
        if use_relu and i < n_layers - 1:
            x = jnp.where(x >= 0, x, 0.2 * x)
    return x


if __name__ == "__main__":
    # Small shapes consistent with the module: batch=2, in_dim=4, 16x16 spatial.
    N, in_dim, H, W = 2, 4, 16, 16
    out_dim = 8
    kernel_size = 5
    layer_num = 3

    key = jax.random.PRNGKey(0)
    key, xkey = jax.random.split(key)
    x = jax.random.normal(xkey, (N, in_dim, H, W), dtype=jnp.float32)

    weights = init_conv_stack_params(
        key, in_dim, out_dim, hid_dim=None,
        kernel_size=kernel_size, layer_num=layer_num,
    )

    for use_relu in (False, True):  # module default is False; also check ReLU path
        out = jax.block_until_ready(conv_stack_forward(x, weights, use_relu=use_relu))
        ref = jax.block_until_ready(_reference_forward(x, weights, use_relu=use_relu))
        assert out.shape == (N, out_dim, H, W), out.shape
        # bf16 operand path (f32 accumulation): expect ~1e-2-scale error vs f32 ref.
        assert jnp.allclose(out, ref, atol=3e-2, rtol=3e-2), \
            f"mismatch vs reference (use_relu={use_relu}), " \
            f"max abs err {jnp.max(jnp.abs(out - ref)):.4f}"

    print("KERNEL_OK")
</pallas_src>

<mosaic_0001>
module attributes {stable_mosaic.version = 11 : i64} {
  func.func @_conv_stack_kernel(%arg0: i32, %arg1: memref<1x4x512xbf16, #tpu.memory_space<vmem>>, %arg2: memref<5x8x20xbf16, #tpu.memory_space<vmem>>, %arg3: memref<5x8x40xbf16, #tpu.memory_space<vmem>>, %arg4: memref<5x8x40xbf16, #tpu.memory_space<vmem>>, %arg5: memref<1x8x320xf32, #tpu.memory_space<vmem>>, %arg6: memref<8x512xbf16, #tpu.memory_space<vmem>>, %arg7: memref<8x512xbf16, #tpu.memory_space<vmem>>, %arg8: memref<40x384xbf16, #tpu.memory_space<vmem>>) attributes {dimension_semantics = [#tpu.dimension_semantics<parallel>], iteration_bounds = array<i64: 2>, scalar_prefetch = 0 : i64, scratch_operands = 3 : i64, tpu.core_type = #tpu.core_type<tc>, window_params = [{transform_indices = @transform_0, window_bounds = array<i64: 1, 4, 512>}, {pipeline_mode = #tpu.pipeline_mode<synchronous>, transform_indices = @transform_1, window_bounds = array<i64: 5, 8, 20>}, {pipeline_mode = #tpu.pipeline_mode<synchronous>, transform_indices = @transform_2, window_bounds = array<i64: 5, 8, 40>}, {pipeline_mode = #tpu.pipeline_mode<synchronous>, transform_indices = @transform_3, window_bounds = array<i64: 5, 8, 40>}, {transform_indices = @transform_4, window_bounds = array<i64: 1, 8, 320>}]} {
    %cst = arith.constant 0.000000e+00 : bf16
    %0 = vector.broadcast %cst : bf16 to vector<8x128xbf16>
    %cst_0 = arith.constant 0.000000e+00 : bf16
    %1 = vector.broadcast %cst_0 : bf16 to vector<8x64xbf16>
    %c0 = arith.constant 0 : index
    %c0_1 = arith.constant 0 : index
    %2 = vector.load %arg6[%c0, %c0_1] : memref<8x512xbf16, #tpu.memory_space<vmem>>, vector<8x128xbf16>
    tpu.vector_store %arg6[%c0, %c0_1], %0 {strides = array<i32>} : memref<8x512xbf16, #tpu.memory_space<vmem>>, vector<8x128xbf16>,
    %c0_2 = arith.constant 0 : index
    %c448 = arith.constant 448 : index
    %3 = vector.load %arg6[%c0_2, %c448] : memref<8x512xbf16, #tpu.memory_space<vmem>>, vector<8x64xbf16>
    tpu.vector_store %arg6[%c0_2, %c448], %1 {strides = array<i32>} : memref<8x512xbf16, #tpu.memory_space<vmem>>, vector<8x64xbf16>,
    %c0_3 = arith.constant 0 : index
    %c0_4 = arith.constant 0 : index
    %4 = vector.load %arg7[%c0_3, %c0_4] : memref<8x512xbf16, #tpu.memory_space<vmem>>, vector<8x128xbf16>
    tpu.vector_store %arg7[%c0_3, %c0_4], %0 {strides = array<i32>} : memref<8x512xbf16, #tpu.memory_space<vmem>>, vector<8x128xbf16>,
    %c0_5 = arith.constant 0 : index
    %c448_6 = arith.constant 448 : index
    %5 = vector.load %arg7[%c0_5, %c448_6] : memref<8x512xbf16, #tpu.memory_space<vmem>>, vector<8x64xbf16>
    tpu.vector_store %arg7[%c0_5, %c448_6], %1 {strides = array<i32>} : memref<8x512xbf16, #tpu.memory_space<vmem>>, vector<8x64xbf16>,
    %6 = tpu.iota {dimensions = array<i32: 1>} : vector<1x320xi32>
    %c20_i32 = arith.constant 20 : i32
    %c0_i32 = arith.constant 0 : i32
    %7 = arith.cmpi eq, %c20_i32, %c0_i32 : i32
    %c1_i32 = arith.constant 1 : i32
    %8 = arith.select %7, %c1_i32, %c20_i32 : i32
    %9 = vector.broadcast %8 : i32 to vector<1x320xi32>
    %10 = arith.remsi %6, %9 : vector<1x320xi32>
    %c0_i32_7 = arith.constant 0 : i32
    %11 = vector.broadcast %c0_i32_7 : i32 to vector<1x320xi32>
    %12 = arith.cmpi ne, %10, %11 : vector<1x320xi32>
    %c0_i32_8 = arith.constant 0 : i32
    %13 = vector.broadcast %c0_i32_8 : i32 to vector<1x320xi32>
    %14 = arith.cmpi slt, %10, %13 : vector<1x320xi32>
    %c0_i32_9 = arith.constant 0 : i32
    %15 = arith.cmpi slt, %8, %c0_i32_9 : i32
    %16 = vector.broadcast %15 : i1 to vector<1x320xi1>
    %17 = vector.broadcast %16 : vector<1x320xi1> to vector<1x320xi1>
    %18 = arith.xori %14, %17 : vector<1x320xi1>
    %19 = arith.andi %18, %12 : vector<1x320xi1>
    %20 = vector.broadcast %8 : i32 to vector<1x320xi32>
    %21 = arith.addi %10, %20 : vector<1x320xi32>
    %22 = arith.select %19, %21, %10 : vector<1x320xi1>, vector<1x320xi32>
    %c16_i32 = arith.constant 16 : i32
    %23 = vector.broadcast %c16_i32 : i32 to vector<1x320xi32>
    %24 = arith.cmpi slt, %22, %23 : vector<1x320xi32>
    %c0_10 = arith.constant 0 : index
    %c0_11 = arith.constant 0 : index
    %c0_12 = arith.constant 0 : index
    %25 = vector.load %arg1[%c0_10, %c0_11, %c0_12] : memref<1x4x512xbf16, #tpu.memory_space<vmem>>, vector<1x4x512xbf16>
    %26 = vector.shape_cast %25 : vector<1x4x512xbf16> to vector<4x512xbf16>
    %27 = vector.extract_strided_slice %26 {offsets = [0, 86], sizes = [4, 324], strides = [1, 1]} : vector<4x512xbf16> to vector<4x324xbf16>
    %c0_13 = arith.constant 0 : index
    %c0_14 = arith.constant 0 : index
    %28 = vector.load %arg8[%c0_13, %c0_14] : memref<40x384xbf16, #tpu.memory_space<vmem>>, vector<4x324xbf16>
    tpu.vector_store %arg8[%c0_13, %c0_14], %27 {strides = array<i32>} : memref<40x384xbf16, #tpu.memory_space<vmem>>, vector<4x324xbf16>,
    %29 = vector.extract_strided_slice %26 {offsets = [0, 106], sizes = [4, 324], strides = [1, 1]} : vector<4x512xbf16> to vector<4x324xbf16>
    %c4 = arith.constant 4 : index
    %c0_15 = arith.constant 0 : index
    %30 = vector.load %arg8[%c4, %c0_15] : memref<40x384xbf16, #tpu.memory_space<vmem>>, vector<4x324xbf16>
    tpu.vector_store %arg8[%c4, %c0_15], %29 {strides = array<i32>} : memref<40x384xbf16, #tpu.memory_space<vmem>>, vector<4x324xbf16>,
    %31 = vector.extract_strided_slice %26 {offsets = [0, 126], sizes = [4, 324], strides = [1, 1]} : vector<4x512xbf16> to vector<4x324xbf16>
    %c8 = arith.constant 8 : index
    %c0_16 = arith.constant 0 : index
    %32 = vector.load %arg8[%c8, %c0_16] : memref<40x384xbf16, #tpu.memory_space<vmem>>, vector<4x324xbf16>
    tpu.vector_store %arg8[%c8, %c0_16], %31 {strides = array<i32>} : memref<40x384xbf16, #tpu.memory_space<vmem>>, vector<4x324xbf16>,
    %33 = vector.extract_strided_slice %26 {offsets = [0, 146], sizes = [4, 324], strides = [1, 1]} : vector<4x512xbf16> to vector<4x324xbf16>
    %c12 = arith.constant 12 : index
    %c0_17 = arith.constant 0 : index
    %34 = vector.load %arg8[%c12, %c0_17] : memref<40x384xbf16, #tpu.memory_space<vmem>>, vector<4x324xbf16>
    tpu.vector_store %arg8[%c12, %c0_17], %33 {strides = array<i32>} : memref<40x384xbf16, #tpu.memory_space<vmem>>, vector<4x324xbf16>,
    %35 = vector.extract_strided_slice %26 {offsets = [0, 166], sizes = [4, 324], strides = [1, 1]} : vector<4x512xbf16> to vector<4x324xbf16>
    %c16 = arith.constant 16 : index
    %c0_18 = arith.constant 0 : index
    %36 = vector.load %arg8[%c16, %c0_18] : memref<40x384xbf16, #tpu.memory_space<vmem>>, vector<4x324xbf16>
    tpu.vector_store %arg8[%c16, %c0_18], %35 {strides = array<i32>} : memref<40x384xbf16, #tpu.memory_space<vmem>>, vector<4x324xbf16>,
    %cst_19 = arith.constant 0.000000e+00 : f32
    %37 = vector.broadcast %cst_19 : f32 to vector<8x320xf32>
    %c0_20 = arith.constant 0 : index
    %c0_21 = arith.constant 0 : index
    %c0_22 = arith.constant 0 : index
    %38 = vector.load %arg2[%c0_20, %c0_21, %c0_22] : memref<5x8x20xbf16, #tpu.memory_space<vmem>>, vector<1x8x20xbf16>
    %39 = vector.shape_cast %38 : vector<1x8x20xbf16> to vector<8x20xbf16>
    %c0_23 = arith.constant 0 : index
    %c0_24 = arith.constant 0 : index
    %40 = vector.load %arg8[%c0_23, %c0_24] : memref<40x384xbf16, #tpu.memory_space<vmem>>, vector<20x320xbf16>
    %cst_25 = arith.constant dense<0.000000e+00> : vector<8x320xf32>
    %41 = tpu.matmul %39, %40, %cst_25 {dimension_numbers = #tpu.dot_dimension_numbers<[1], [0], [0], [1], [0, 0, 1, 1], [], []>} : vector<8x20xbf16>, vector<20x320xbf16>, vector<8x320xf32> -> vector<8x320xf32>
    %42 = arith.addf %37, %41 : vector<8x320xf32>
    %c1 = arith.constant 1 : index
    %c0_26 = arith.constant 0 : index
    %c0_27 = arith.constant 0 : index
    %43 = vector.load %arg2[%c1, %c0_26, %c0_27] : memref<5x8x20xbf16, #tpu.memory_space<vmem>>, vector<1x8x20xbf16>
    %44 = vector.shape_cast %43 : vector<1x8x20xbf16> to vector<8x20xbf16>
    %c0_28 = arith.constant 0 : index
    %c1_29 = arith.constant 1 : index
    %45 = vector.load %arg8[%c0_28, %c1_29] : memref<40x384xbf16, #tpu.memory_space<vmem>>, vector<20x320xbf16>
    %cst_30 = arith.constant dense<0.000000e+00> : vector<8x320xf32>
    %46 = tpu.matmul %44, %45, %cst_30 {dimension_numbers = #tpu.dot_dimension_numbers<[1], [0], [0], [1], [0, 0, 1, 1], [], []>} : vector<8x20xbf16>, vector<20x320xbf16>, vector<8x320xf32> -> vector<8x320xf32>
    %47 = arith.addf %42, %46 : vector<8x320xf32>
    %c2 = arith.constant 2 : index
    %c0_31 = arith.constant 0 : index
    %c0_32 = arith.constant 0 : index
    %48 = vector.load %arg2[%c2, %c0_31, %c0_32] : memref<5x8x20xbf16, #tpu.memory_space<vmem>>, vector<1x8x20xbf16>
    %49 = vector.shape_cast %48 : vector<1x8x20xbf16> to vector<8x20xbf16>
    %c0_33 = arith.constant 0 : index
    %c2_34 = arith.constant 2 : index
    %50 = vector.load %arg8[%c0_33, %c2_34] : memref<40x384xbf16, #tpu.memory_space<vmem>>, vector<20x320xbf16>
    %cst_35 = arith.constant dense<0.000000e+00> : vector<8x320xf32>
    %51 = tpu.matmul %49, %50, %cst_35 {dimension_numbers = #tpu.dot_dimension_numbers<[1], [0], [0], [1], [0, 0, 1, 1], [], []>} : vector<8x20xbf16>, vector<20x320xbf16>, vector<8x320xf32> -> vector<8x320xf32>
    %52 = arith.addf %47, %51 : vector<8x320xf32>
    %c3 = arith.constant 3 : index
    %c0_36 = arith.constant 0 : index
    %c0_37 = arith.constant 0 : index
    %53 = vector.load %arg2[%c3, %c0_36, %c0_37] : memref<5x8x20xbf16, #tpu.memory_space<vmem>>, vector<1x8x20xbf16>
    %54 = vector.shape_cast %53 : vector<1x8x20xbf16> to vector<8x20xbf16>
    %c0_38 = arith.constant 0 : index
    %c3_39 = arith.constant 3 : index
    %55 = vector.load %arg8[%c0_38, %c3_39] : memref<40x384xbf16, #tpu.memory_space<vmem>>, vector<20x320xbf16>
    %cst_40 = arith.constant dense<0.000000e+00> : vector<8x320xf32>
    %56 = tpu.matmul %54, %55, %cst_40 {dimension_numbers = #tpu.dot_dimension_numbers<[1], [0], [0], [1], [0, 0, 1, 1], [], []>} : vector<8x20xbf16>, vector<20x320xbf16>, vector<8x320xf32> -> vector<8x320xf32>
    %57 = arith.addf %52, %56 : vector<8x320xf32>
    %c4_41 = arith.constant 4 : index
    %c0_42 = arith.constant 0 : index
    %c0_43 = arith.constant 0 : index
    %58 = vector.load %arg2[%c4_41, %c0_42, %c0_43] : memref<5x8x20xbf16, #tpu.memory_space<vmem>>, vector<1x8x20xbf16>
    %59 = vector.shape_cast %58 : vector<1x8x20xbf16> to vector<8x20xbf16>
    %c0_44 = arith.constant 0 : index
    %c4_45 = arith.constant 4 : index
    %60 = vector.load %arg8[%c0_44, %c4_45] : memref<40x384xbf16, #tpu.memory_space<vmem>>, vector<20x320xbf16>
    %cst_46 = arith.constant dense<0.000000e+00> : vector<8x320xf32>
    %61 = tpu.matmul %59, %60, %cst_46 {dimension_numbers = #tpu.dot_dimension_numbers<[1], [0], [0], [1], [0, 0, 1, 1], [], []>} : vector<8x20xbf16>, vector<20x320xbf16>, vector<8x320xf32> -> vector<8x320xf32>
    %62 = arith.addf %57, %61 : vector<8x320xf32>
    %cst_47 = arith.constant 0.000000e+00 : f32
    %63 = vector.shape_cast %24 : vector<1x320xi1> to vector<1x320xi1>
    %64 = vector.broadcast %63 : vector<1x320xi1> to vector<8x320xi1>
    %65 = vector.broadcast %cst_47 : f32 to vector<8x320xf32>
    %66 = arith.select %64, %62, %65 : vector<8x320xi1>, vector<8x320xf32>
    %67 = arith.truncf %66 : vector<8x320xf32> to vector<8x320xbf16>
    %c0_48 = arith.constant 0 : index
    %c128 = arith.constant 128 : index
    %68 = vector.load %arg6[%c0_48, %c128] : memref<8x512xbf16, #tpu.memory_space<vmem>>, vector<8x320xbf16>
    tpu.vector_store %arg6[%c0_48, %c128], %67 {strides = array<i32>} : memref<8x512xbf16, #tpu.memory_space<vmem>>, vector<8x320xbf16>,
    %c0_49 = arith.constant 0 : index
    %c86 = arith.constant 86 : index
    %69 = vector.load %arg6[%c0_49, %c86] : memref<8x512xbf16, #tpu.memory_space<vmem>>, vector<8x324xbf16>
    %c0_50 = arith.constant 0 : index
    %c0_51 = arith.constant 0 : index
    %70 = vector.load %arg8[%c0_50, %c0_51] : memref<40x384xbf16, #tpu.memory_space<vmem>>, vector<8x324xbf16>
    tpu.vector_store %arg8[%c0_50, %c0_51], %69 {strides = array<i32>} : memref<40x384xbf16, #tpu.memory_space<vmem>>, vector<8x324xbf16>,
    %c0_52 = arith.constant 0 : index
    %c106 = arith.constant 106 : index
    %71 = vector.load %arg6[%c0_52, %c106] : memref<8x512xbf16, #tpu.memory_space<vmem>>, vector<8x324xbf16>
    %c8_53 = arith.constant 8 : index
    %c0_54 = arith.constant 0 : index
    %72 = vector.load %arg8[%c8_53, %c0_54] : memref<40x384xbf16, #tpu.memory_space<vmem>>, vector<8x324xbf16>
    tpu.vector_store %arg8[%c8_53, %c0_54], %71 {strides = array<i32>} : memref<40x384xbf16, #tpu.memory_space<vmem>>, vector<8x324xbf16>,
    %c0_55 = arith.constant 0 : index
    %c126 = arith.constant 126 : index
    %73 = vector.load %arg6[%c0_55, %c126] : memref<8x512xbf16, #tpu.memory_space<vmem>>, vector<8x324xbf16>
    %c16_56 = arith.constant 16 : index
    %c0_57 = arith.constant 0 : index
    %74 = vector.load %arg8[%c16_56, %c0_57] : memref<40x384xbf16, #tpu.memory_space<vmem>>, vector<8x324xbf16>
    tpu.vector_store %arg8[%c16_56, %c0_57], %73 {strides = array<i32>} : memref<40x384xbf16, #tpu.memory_space<vmem>>, vector<8x324xbf16>,
    %c0_58 = arith.constant 0 : index
    %c146 = arith.constant 146 : index
    %75 = vector.load %arg6[%c0_58, %c146] : memref<8x512xbf16, #tpu.memory_space<vmem>>, vector<8x324xbf16>
    %c24 = arith.constant 24 : index
    %c0_59 = arith.constant 0 : index
    %76 = vector.load %arg8[%c24, %c0_59] : memref<40x384xbf16, #tpu.memory_space<vmem>>, vector<8x324xbf16>
    tpu.vector_store %arg8[%c24, %c0_59], %75 {strides = array<i32>} : memref<40x384xbf16, #tpu.memory_space<vmem>>, vector<8x324xbf16>,
    %c0_60 = arith.constant 0 : index
    %c166 = arith.constant 166 : index
    %77 = vector.load %arg6[%c0_60, %c166] : memref<8x512xbf16, #tpu.memory_space<vmem>>, vector<8x324xbf16>
    %c32 = arith.constant 32 : index
    %c0_61 = arith.constant 0 : index
    %78 = vector.load %arg8[%c32, %c0_61] : memref<40x384xbf16, #tpu.memory_space<vmem>>, vector<8x324xbf16>
    tpu.vector_store %arg8[%c32, %c0_61], %77 {strides = array<i32>} : memref<40x384xbf16, #tpu.memory_space<vmem>>, vector<8x324xbf16>,
    %cst_62 = arith.constant 0.000000e+00 : f32
    %79 = vector.broadcast %cst_62 : f32 to vector<8x320xf32>
    %c0_63 = arith.constant 0 : index
    %c0_64 = arith.constant 0 : index
    %c0_65 = arith.constant 0 : index
    %80 = vector.load %arg3[%c0_63, %c0_64, %c0_65] : memref<5x8x40xbf16, #tpu.memory_space<vmem>>, vector<1x8x40xbf16>
    %81 = vector.shape_cast %80 : vector<1x8x40xbf16> to vector<8x40xbf16>
    %c0_66 = arith.constant 0 : index
    %c0_67 = arith.constant 0 : index
    %82 = vector.load %arg8[%c0_66, %c0_67] : memref<40x384xbf16, #tpu.memory_space<vmem>>, vector<40x320xbf16>
    %cst_68 = arith.constant dense<0.000000e+00> : vector<8x320xf32>
    %83 = tpu.matmul %81, %82, %cst_68 {dimension_numbers = #tpu.dot_dimension_numbers<[1], [0], [0], [1], [0, 0, 1, 1], [], []>} : vector<8x40xbf16>, vector<40x320xbf16>, vector<8x320xf32> -> vector<8x320xf32>
    %84 = arith.addf %79, %83 : vector<8x320xf32>
    %c1_69 = arith.constant 1 : index
    %c0_70 = arith.constant 0 : index
    %c0_71 = arith.constant 0 : index
    %85 = vector.load %arg3[%c1_69, %c0_70, %c0_71] : memref<5x8x40xbf16, #tpu.memory_space<vmem>>, vector<1x8x40xbf16>
    %86 = vector.shape_cast %85 : vector<1x8x40xbf16> to vector<8x40xbf16>
    %c0_72 = arith.constant 0 : index
    %c1_73 = arith.constant 1 : index
    %87 = vector.load %arg8[%c0_72, %c1_73] : memref<40x384xbf16, #tpu.memory_space<vmem>>, vector<40x320xbf16>
    %cst_74 = arith.constant dense<0.000000e+00> : vector<8x320xf32>
    %88 = tpu.matmul %86, %87, %cst_74 {dimension_numbers = #tpu.dot_dimension_numbers<[1], [0], [0], [1], [0, 0, 1, 1], [], []>} : vector<8x40xbf16>, vector<40x320xbf16>, vector<8x320xf32> -> vector<8x320xf32>
    %89 = arith.addf %84, %88 : vector<8x320xf32>
    %c2_75 = arith.constant 2 : index
    %c0_76 = arith.constant 0 : index
    %c0_77 = arith.constant 0 : index
    %90 = vector.load %arg3[%c2_75, %c0_76, %c0_77] : memref<5x8x40xbf16, #tpu.memory_space<vmem>>, vector<1x8x40xbf16>
    %91 = vector.shape_cast %90 : vector<1x8x40xbf16> to vector<8x40xbf16>
    %c0_78 = arith.constant 0 : index
    %c2_79 = arith.constant 2 : index
    %92 = vector.load %arg8[%c0_78, %c2_79] : memref<40x384xbf16, #tpu.memory_space<vmem>>, vector<40x320xbf16>
    %cst_80 = arith.constant dense<0.000000e+00> : vector<8x320xf32>
    %93 = tpu.matmul %91, %92, %cst_80 {dimension_numbers = #tpu.dot_dimension_numbers<[1], [0], [0], [1], [0, 0, 1, 1], [], []>} : vector<8x40xbf16>, vector<40x320xbf16>, vector<8x320xf32> -> vector<8x320xf32>
    %94 = arith.addf %89, %93 : vector<8x320xf32>
    %c3_81 = arith.constant 3 : index
    %c0_82 = arith.constant 0 : index
    %c0_83 = arith.constant 0 : index
    %95 = vector.load %arg3[%c3_81, %c0_82, %c0_83] : memref<5x8x40xbf16, #tpu.memory_space<vmem>>, vector<1x8x40xbf16>
    %96 = vector.shape_cast %95 : vector<1x8x40xbf16> to vector<8x40xbf16>
    %c0_84 = arith.constant 0 : index
    %c3_85 = arith.constant 3 : index
    %97 = vector.load %arg8[%c0_84, %c3_85] : memref<40x384xbf16, #tpu.memory_space<vmem>>, vector<40x320xbf16>
    %cst_86 = arith.constant dense<0.000000e+00> : vector<8x320xf32>
    %98 = tpu.matmul %96, %97, %cst_86 {dimension_numbers = #tpu.dot_dimension_numbers<[1], [0], [0], [1], [0, 0, 1, 1], [], []>} : vector<8x40xbf16>, vector<40x320xbf16>, vector<8x320xf32> -> vector<8x320xf32>
    %99 = arith.addf %94, %98 : vector<8x320xf32>
    %c4_87 = arith.constant 4 : index
    %c0_88 = arith.constant 0 : index
    %c0_89 = arith.constant 0 : index
    %100 = vector.load %arg3[%c4_87, %c0_88, %c0_89] : memref<5x8x40xbf16, #tpu.memory_space<vmem>>, vector<1x8x40xbf16>
    %101 = vector.shape_cast %100 : vector<1x8x40xbf16> to vector<8x40xbf16>
    %c0_90 = arith.constant 0 : index
    %c4_91 = arith.constant 4 : index
    %102 = vector.load %arg8[%c0_90, %c4_91] : memref<40x384xbf16, #tpu.memory_space<vmem>>, vector<40x320xbf16>
    %cst_92 = arith.constant dense<0.000000e+00> : vector<8x320xf32>
    %103 = tpu.matmul %101, %102, %cst_92 {dimension_numbers = #tpu.dot_dimension_numbers<[1], [0], [0], [1], [0, 0, 1, 1], [], []>} : vector<8x40xbf16>, vector<40x320xbf16>, vector<8x320xf32> -> vector<8x320xf32>
    %104 = arith.addf %99, %103 : vector<8x320xf32>
    %cst_93 = arith.constant 0.000000e+00 : f32
    %105 = vector.shape_cast %24 : vector<1x320xi1> to vector<1x320xi1>
    %106 = vector.broadcast %105 : vector<1x320xi1> to vector<8x320xi1>
    %107 = vector.broadcast %cst_93 : f32 to vector<8x320xf32>
    %108 = arith.select %106, %104, %107 : vector<8x320xi1>, vector<8x320xf32>
    %109 = arith.truncf %108 : vector<8x320xf32> to vector<8x320xbf16>
    %c0_94 = arith.constant 0 : index
    %c128_95 = arith.constant 128 : index
    %110 = vector.load %arg7[%c0_94, %c128_95] : memref<8x512xbf16, #tpu.memory_space<vmem>>, vector<8x320xbf16>
    tpu.vector_store %arg7[%c0_94, %c128_95], %109 {strides = array<i32>} : memref<8x512xbf16, #tpu.memory_space<vmem>>, vector<8x320xbf16>,
    %c0_96 = arith.constant 0 : index
    %c86_97 = arith.constant 86 : index
    %111 = vector.load %arg7[%c0_96, %c86_97] : memref<8x512xbf16, #tpu.memory_space<vmem>>, vector<8x324xbf16>
    %c0_98 = arith.constant 0 : index
    %c0_99 = arith.constant 0 : index
    %112 = vector.load %arg8[%c0_98, %c0_99] : memref<40x384xbf16, #tpu.memory_space<vmem>>, vector<8x324xbf16>
    tpu.vector_store %arg8[%c0_98, %c0_99], %111 {strides = array<i32>} : memref<40x384xbf16, #tpu.memory_space<vmem>>, vector<8x324xbf16>,
    %c0_100 = arith.constant 0 : index
    %c106_101 = arith.constant 106 : index
    %113 = vector.load %arg7[%c0_100, %c106_101] : memref<8x512xbf16, #tpu.memory_space<vmem>>, vector<8x324xbf16>
    %c8_102 = arith.constant 8 : index
    %c0_103 = arith.constant 0 : index
    %114 = vector.load %arg8[%c8_102, %c0_103] : memref<40x384xbf16, #tpu.memory_space<vmem>>, vector<8x324xbf16>
    tpu.vector_store %arg8[%c8_102, %c0_103], %113 {strides = array<i32>} : memref<40x384xbf16, #tpu.memory_space<vmem>>, vector<8x324xbf16>,
    %c0_104 = arith.constant 0 : index
    %c126_105 = arith.constant 126 : index
    %115 = vector.load %arg7[%c0_104, %c126_105] : memref<8x512xbf16, #tpu.memory_space<vmem>>, vector<8x324xbf16>
    %c16_106 = arith.constant 16 : index
    %c0_107 = arith.constant 0 : index
    %116 = vector.load %arg8[%c16_106, %c0_107] : memref<40x384xbf16, #tpu.memory_space<vmem>>, vector<8x324xbf16>
    tpu.vector_store %arg8[%c16_106, %c0_107], %115 {strides = array<i32>} : memref<40x384xbf16, #tpu.memory_space<vmem>>, vector<8x324xbf16>,
    %c0_108 = arith.constant 0 : index
    %c146_109 = arith.constant 146 : index
    %117 = vector.load %arg7[%c0_108, %c146_109] : memref<8x512xbf16, #tpu.memory_space<vmem>>, vector<8x324xbf16>
    %c24_110 = arith.constant 24 : index
    %c0_111 = arith.constant 0 : index
    %118 = vector.load %arg8[%c24_110, %c0_111] : memref<40x384xbf16, #tpu.memory_space<vmem>>, vector<8x324xbf16>
    tpu.vector_store %arg8[%c24_110, %c0_111], %117 {strides = array<i32>} : memref<40x384xbf16, #tpu.memory_space<vmem>>, vector<8x324xbf16>,
    %c0_112 = arith.constant 0 : index
    %c166_113 = arith.constant 166 : index
    %119 = vector.load %arg7[%c0_112, %c166_113] : memref<8x512xbf16, #tpu.memory_space<vmem>>, vector<8x324xbf16>
    %c32_114 = arith.constant 32 : index
    %c0_115 = arith.constant 0 : index
    %120 = vector.load %arg8[%c32_114, %c0_115] : memref<40x384xbf16, #tpu.memory_space<vmem>>, vector<8x324xbf16>
    tpu.vector_store %arg8[%c32_114, %c0_115], %119 {strides = array<i32>} : memref<40x384xbf16, #tpu.memory_space<vmem>>, vector<8x324xbf16>,
    %cst_116 = arith.constant 0.000000e+00 : f32
    %121 = vector.broadcast %cst_116 : f32 to vector<8x320xf32>
    %c0_117 = arith.constant 0 : index
    %c0_118 = arith.constant 0 : index
    %c0_119 = arith.constant 0 : index
    %122 = vector.load %arg4[%c0_117, %c0_118, %c0_119] : memref<5x8x40xbf16, #tpu.memory_space<vmem>>, vector<1x8x40xbf16>
    %123 = vector.shape_cast %122 : vector<1x8x40xbf16> to vector<8x40xbf16>
    %c0_120 = arith.constant 0 : index
    %c0_121 = arith.constant 0 : index
    %124 = vector.load %arg8[%c0_120, %c0_121] : memref<40x384xbf16, #tpu.memory_space<vmem>>, vector<40x320xbf16>
    %cst_122 = arith.constant dense<0.000000e+00> : vector<8x320xf32>
    %125 = tpu.matmul %123, %124, %cst_122 {dimension_numbers = #tpu.dot_dimension_numbers<[1], [0], [0], [1], [0, 0, 1, 1], [], []>} : vector<8x40xbf16>, vector<40x320xbf16>, vector<8x320xf32> -> vector<8x320xf32>
    %126 = arith.addf %121, %125 : vector<8x320xf32>
    %c1_123 = arith.constant 1 : index
    %c0_124 = arith.constant 0 : index
    %c0_125 = arith.constant 0 : index
    %127 = vector.load %arg4[%c1_123, %c0_124, %c0_125] : memref<5x8x40xbf16, #tpu.memory_space<vmem>>, vector<1x8x40xbf16>
    %128 = vector.shape_cast %127 : vector<1x8x40xbf16> to vector<8x40xbf16>
    %c0_126 = arith.constant 0 : index
    %c1_127 = arith.constant 1 : index
    %129 = vector.load %arg8[%c0_126, %c1_127] : memref<40x384xbf16, #tpu.memory_space<vmem>>, vector<40x320xbf16>
    %cst_128 = arith.constant dense<0.000000e+00> : vector<8x320xf32>
    %130 = tpu.matmul %128, %129, %cst_128 {dimension_numbers = #tpu.dot_dimension_numbers<[1], [0], [0], [1], [0, 0, 1, 1], [], []>} : vector<8x40xbf16>, vector<40x320xbf16>, vector<8x320xf32> -> vector<8x320xf32>
    %131 = arith.addf %126, %130 : vector<8x320xf32>
    %c2_129 = arith.constant 2 : index
    %c0_130 = arith.constant 0 : index
    %c0_131 = arith.constant 0 : index
    %132 = vector.load %arg4[%c2_129, %c0_130, %c0_131] : memref<5x8x40xbf16, #tpu.memory_space<vmem>>, vector<1x8x40xbf16>
    %133 = vector.shape_cast %132 : vector<1x8x40xbf16> to vector<8x40xbf16>
    %c0_132 = arith.constant 0 : index
    %c2_133 = arith.constant 2 : index
    %134 = vector.load %arg8[%c0_132, %c2_133] : memref<40x384xbf16, #tpu.memory_space<vmem>>, vector<40x320xbf16>
    %cst_134 = arith.constant dense<0.000000e+00> : vector<8x320xf32>
    %135 = tpu.matmul %133, %134, %cst_134 {dimension_numbers = #tpu.dot_dimension_numbers<[1], [0], [0], [1], [0, 0, 1, 1], [], []>} : vector<8x40xbf16>, vector<40x320xbf16>, vector<8x320xf32> -> vector<8x320xf32>
    %136 = arith.addf %131, %135 : vector<8x320xf32>
    %c3_135 = arith.constant 3 : index
    %c0_136 = arith.constant 0 : index
    %c0_137 = arith.constant 0 : index
    %137 = vector.load %arg4[%c3_135, %c0_136, %c0_137] : memref<5x8x40xbf16, #tpu.memory_space<vmem>>, vector<1x8x40xbf16>
    %138 = vector.shape_cast %137 : vector<1x8x40xbf16> to vector<8x40xbf16>
    %c0_138 = arith.constant 0 : index
    %c3_139 = arith.constant 3 : index
    %139 = vector.load %arg8[%c0_138, %c3_139] : memref<40x384xbf16, #tpu.memory_space<vmem>>, vector<40x320xbf16>
    %cst_140 = arith.constant dense<0.000000e+00> : vector<8x320xf32>
    %140 = tpu.matmul %138, %139, %cst_140 {dimension_numbers = #tpu.dot_dimension_numbers<[1], [0], [0], [1], [0, 0, 1, 1], [], []>} : vector<8x40xbf16>, vector<40x320xbf16>, vector<8x320xf32> -> vector<8x320xf32>
    %141 = arith.addf %136, %140 : vector<8x320xf32>
    %c4_141 = arith.constant 4 : index
    %c0_142 = arith.constant 0 : index
    %c0_143 = arith.constant 0 : index
    %142 = vector.load %arg4[%c4_141, %c0_142, %c0_143] : memref<5x8x40xbf16, #tpu.memory_space<vmem>>, vector<1x8x40xbf16>
    %143 = vector.shape_cast %142 : vector<1x8x40xbf16> to vector<8x40xbf16>
    %c0_144 = arith.constant 0 : index
    %c4_145 = arith.constant 4 : index
    %144 = vector.load %arg8[%c0_144, %c4_145] : memref<40x384xbf16, #tpu.memory_space<vmem>>, vector<40x320xbf16>
    %cst_146 = arith.constant dense<0.000000e+00> : vector<8x320xf32>
    %145 = tpu.matmul %143, %144, %cst_146 {dimension_numbers = #tpu.dot_dimension_numbers<[1], [0], [0], [1], [0, 0, 1, 1], [], []>} : vector<8x40xbf16>, vector<40x320xbf16>, vector<8x320xf32> -> vector<8x320xf32>
    %146 = arith.addf %141, %145 : vector<8x320xf32>
    %c0_147 = arith.constant 0 : index
    %c0_148 = arith.constant 0 : index
    %c0_149 = arith.constant 0 : index
    %147 = vector.load %arg5[%c0_147, %c0_148, %c0_149] : memref<1x8x320xf32, #tpu.memory_space<vmem>>, vector<1x8x320xf32>
    %148 = vector.shape_cast %147 : vector<1x8x320xf32> to vector<8x320xf32>
    %149 = vector.shape_cast %146 : vector<8x320xf32> to vector<1x8x320xf32>
    tpu.vector_store %arg5[%c0_147, %c0_148, %c0_149], %149 {strides = array<i32>} : memref<1x8x320xf32, #tpu.memory_space<vmem>>, vector<1x8x320xf32>,
    return
  }
  func.func @transform_0(%arg0: i32) -> (i32, i32, i32) {
    %c0_i32 = arith.constant 0 : i32
    %c0_i32_0 = arith.constant 0 : i32
    %c0_i32_1 = arith.constant 0 : i32
    return %arg0, %c0_i32, %c0_i32_0 : i32, i32, i32
  }
  func.func @transform_1(%arg0: i32) -> (i32, i32, i32) {
    %c0_i32 = arith.constant 0 : i32
    %c0_i32_0 = arith.constant 0 : i32
    %c0_i32_1 = arith.constant 0 : i32
    %c0_i32_2 = arith.constant 0 : i32
    return %c0_i32, %c0_i32_0, %c0_i32_1 : i32, i32, i32
  }
  func.func @transform_2(%arg0: i32) -> (i32, i32, i32) {
    %c0_i32 = arith.constant 0 : i32
    %c0_i32_0 = arith.constant 0 : i32
    %c0_i32_1 = arith.constant 0 : i32
    %c0_i32_2 = arith.constant 0 : i32
    return %c0_i32, %c0_i32_0, %c0_i32_1 : i32, i32, i32
  }
  func.func @transform_3(%arg0: i32) -> (i32, i32, i32) {
    %c0_i32 = arith.constant 0 : i32
    %c0_i32_0 = arith.constant 0 : i32
    %c0_i32_1 = arith.constant 0 : i32
    %c0_i32_2 = arith.constant 0 : i32
    return %c0_i32, %c0_i32_0, %c0_i32_1 : i32, i32, i32
  }
  func.func @transform_4(%arg0: i32) -> (i32, i32, i32) {
    %c0_i32 = arith.constant 0 : i32
    %c0_i32_0 = arith.constant 0 : i32
    %c0_i32_1 = arith.constant 0 : i32
    return %arg0, %c0_i32, %c0_i32_0 : i32, i32, i32
  }
}

</mosaic_0001>

<llo_original>
// kernel: tpu_custom_call.1
$region0: #{tpu_custom_call.1}
  #allocation0 [shape = 'u32[]', space=smem, size = 0x4, offset = 0x4, fixed_abs, tag = 'smem constant byte address 0x4 - core index']
  #allocation1 [shape = 'u32[72,128]{1,0:T(1,128)}', space=vmem, size = 0x9000, scoped, tag = 'internal scratch']
  #allocation2 [shape = 'bf16[8,512]{1,0:T(8,128)(2,1)}', space=vmem, size = 0x2000, scoped, tag = 'scratch operand']
  #allocation3 [shape = 'bf16[8,512]{1,0:T(8,128)(2,1)}', space=vmem, size = 0x2000, scoped, tag = 'scratch operand']
  #allocation4 [shape = 'bf16[40,384]{1,0:T(8,128)(2,1)}', space=vmem, size = 0x7800, scoped, tag = 'scratch operand']
  %s0 = inlined_call_operand.hbm [shape: bf16[2,4,512], index: 0, kind: input, shape index: {}]
  %s1 = inlined_call_operand.hbm [shape: bf16[5,8,20], index: 1, kind: input, shape index: {}]
  %s2 = inlined_call_operand.hbm [shape: bf16[5,8,40], index: 2, kind: input, shape index: {}]
  %s3 = inlined_call_operand.hbm [shape: bf16[5,8,40], index: 3, kind: input, shape index: {}]
  %s4 = inlined_call_operand.hbm [shape: f32[2,8,320], index: 4, kind: output, shape index: {}]
  %s5 = sld [smem:[#allocation0]]
  $region65: #{tpu_custom_call.1} parent=0
    _
  %s7 = ssub.s32 1, %s5
  %s8 = scalar_select 0, %s7, %s5
  $region1: #{tpu_custom_call.1} parent=0
    #allocation5 [shape = 'u8[8192]{0}', space=vmem, size = 0x2000, scoped, tag = 'input window, operand 0']
    #allocation6 [shape = 's32[2]{0}', space=sflag, size = 0x8, scoped, tag = 'scoped memory for tpu_custom_call.1']
    #allocation7 [shape = 's32[2]{0}', space=sflag, size = 0x8, scoped, tag = 'scoped memory for tpu_custom_call.1']
    #allocation8 [shape = 'u8[10240]{0}', space=vmem, size = 0x2800, scoped, tag = 'input window, operand 1, single buffered']
    #allocation9 [shape = 's32[1]{0}', space=sflag, size = 0x4, scoped, tag = 'scoped memory for tpu_custom_call.1']
    #allocation10 [shape = 'u8[10240]{0}', space=vmem, size = 0x2800, scoped, tag = 'input window, operand 2, single buffered']
    #allocation11 [shape = 'u8[10240]{0}', space=vmem, size = 0x2800, scoped, tag = 'input window, operand 3, single buffered']
    #allocation12 [shape = 's32[1]{0}', space=sflag, size = 0x4, scoped, tag = 'scoped memory for tpu_custom_call.1']
    #allocation13 [shape = 'u8[24576]{0}', space=vmem, size = 0x6000, scoped, tag = 'output window, operand 0']
    %9 = vsyncpa [#allocation6], 0
    %s10 = scalar_lea.sflag [#allocation6], 1
    %11 = vsyncpa %s10, 0
    %12 = vsyncpa [#allocation9], 0
    %13 = vsyncpa [#allocation12], 0
    %14 = vsyncpa [#allocation7], 0
    %s15 = scalar_lea.sflag [#allocation7], 1
    %16 = vsyncpa %s15, 0
    loop: start=0, step=1, limit=4
    $region2: #{tpu_custom_call.1} parent=1 // loop_pre_header
      _
    $region3: #{tpu_custom_call.1} parent=1 // loop_header
      %s18 = sphi 0, %s22
      %p19 = scmp.ge.s32.totalorder %s18, 4
      %s28 = sphi 0, %s30
      %s31 = sphi 0, %s28
      %s32 = sphi 0, %s31
      %s48 = sphi 0, %s32
      %s52 = sphi 0, %s52
      %s54 = sphi 0, %s52
      %s55 = sphi 0, %s54
      %s69 = sphi 0, %s55
      %s73 = sphi 0, %s73
      %s75 = sphi 0, %s73
      %s76 = sphi 0, %s75
      %s90 = sphi 0, %s76
      %s94 = sphi 0, %s94
      %s96 = sphi 0, %s94
      %s97 = sphi 0, %s96
      %s111 = sphi 0, %s97
      %s117 = sphi 0, %s119
      %s120 = sphi 0, %s117
      %s121 = sphi 0, %s120
      %s137 = sphi 0, %s121
    $region4: #{tpu_custom_call.1} parent=1 // loop_header_branch
      %21 = sbr.rel (%p19) target = $region8
    $region5: #{tpu_custom_call.1} parent=1 // loop_body
      %s23 = ssub.s32 %s18, 1
      %s24 = ssub.s32 %s18, 2
      %s25 = sadd.s32 %s18, 1
      %s26 = ssub.s32 %s18, %s25
      %p27 = scmp.eq.s32.totalorder %s26, 0
      %s29 = sadd.s32 %s28, 1
      %s30 = scalar_select %p27, %s28, %s29
      %p33 = pneg %p27
      %p34 = scmp.eq.s32.totalorder %s18, 1
      %p35 = por %p33, %p34
      %p36 = scmp.ne.s32.totalorder %s28, %s31
      %p37 = scmp.eq.s32.totalorder %s18, 0
      %p38 = por %p36, %p37
      %p39 = scmp.ne.s32.totalorder %s28, %s31
      %p40 = scmp.eq.s32.totalorder %s23, 1
      %p41 = por %p39, %p40
      %p42 = scmp.ne.s32.totalorder %s31, %s32
      %p43 = scmp.eq.s32.totalorder %s23, 0
      %p44 = por %p42, %p43
      %p45 = scmp.ne.s32.totalorder %s31, %s32
      %p46 = scmp.eq.s32.totalorder %s24, 1
      %p47 = por %p45, %p46
      %p49 = scmp.ne.s32.totalorder %s32, %s48
      %p50 = scmp.eq.s32.totalorder %s24, 0
      %p51 = por %p49, %p50
      %s53 = sadd.s32 %s52, 1
      %p56 = scmp.eq.s32.totalorder %s18, 1
      %p57 = scmp.ne.s32.totalorder %s52, %s54
      %p58 = scmp.eq.s32.totalorder %s18, 0
      %p59 = por %p57, %p58
      %p60 = scmp.ne.s32.totalorder %s52, %s54
      %p61 = scmp.eq.s32.totalorder %s23, 1
      %p62 = por %p60, %p61
      %p63 = scmp.ne.s32.totalorder %s54, %s55
      %p64 = scmp.eq.s32.totalorder %s23, 0
      %p65 = por %p63, %p64
      %p66 = scmp.ne.s32.totalorder %s54, %s55
      %p67 = scmp.eq.s32.totalorder %s24, 1
      %p68 = por %p66, %p67
      %p70 = scmp.ne.s32.totalorder %s55, %s69
      %p71 = scmp.eq.s32.totalorder %s24, 0
      %p72 = por %p70, %p71
      %s74 = sadd.s32 %s73, 1
      %p77 = scmp.eq.s32.totalorder %s18, 1
      %p78 = scmp.ne.s32.totalorder %s73, %s75
      %p79 = scmp.eq.s32.totalorder %s18, 0
      %p80 = por %p78, %p79
      %p81 = scmp.ne.s32.totalorder %s73, %s75
      %p82 = scmp.eq.s32.totalorder %s23, 1
      %p83 = por %p81, %p82
      %p84 = scmp.ne.s32.totalorder %s75, %s76
      %p85 = scmp.eq.s32.totalorder %s23, 0
      %p86 = por %p84, %p85
      %p87 = scmp.ne.s32.totalorder %s75, %s76
      %p88 = scmp.eq.s32.totalorder %s24, 1
      %p89 = por %p87, %p88
      %p91 = scmp.ne.s32.totalorder %s76, %s90
      %p92 = scmp.eq.s32.totalorder %s24, 0
      %p93 = por %p91, %p92
      %s95 = sadd.s32 %s94, 1
      %p98 = scmp.eq.s32.totalorder %s18, 1
      %p99 = scmp.ne.s32.totalorder %s94, %s96
      %p100 = scmp.eq.s32.totalorder %s18, 0
      %p101 = por %p99, %p100
      %p102 = scmp.ne.s32.totalorder %s94, %s96
      %p103 = scmp.eq.s32.totalorder %s23, 1
      %p104 = por %p102, %p103
      %p105 = scmp.ne.s32.totalorder %s96, %s97
      %p106 = scmp.eq.s32.totalorder %s23, 0
      %p107 = por %p105, %p106
      %p108 = scmp.ne.s32.totalorder %s96, %s97
      %p109 = scmp.eq.s32.totalorder %s24, 1
      %p110 = por %p108, %p109
      %p112 = scmp.ne.s32.totalorder %s97, %s111
      %p113 = scmp.eq.s32.totalorder %s24, 0
      %p114 = por %p112, %p113
      %s115 = ssub.s32 %s18, %s25
      %p116 = scmp.eq.s32.totalorder %s115, 0
      %s118 = sadd.s32 %s117, 1
      %s119 = scalar_select %p116, %s117, %s118
      %p122 = pneg %p116
      %p123 = scmp.eq.s32.totalorder %s18, 1
      %p124 = por %p122, %p123
      %p125 = scmp.ne.s32.totalorder %s117, %s120
      %p126 = scmp.eq.s32.totalorder %s18, 0
      %p127 = por %p125, %p126
      %p128 = scmp.ne.s32.totalorder %s117, %s120
      %p129 = scmp.eq.s32.totalorder %s23, 1
      %p130 = por %p128, %p129
      %p131 = scmp.ne.s32.totalorder %s120, %s121
      %p132 = scmp.eq.s32.totalorder %s23, 0
      %p133 = por %p131, %p132
      %p134 = scmp.ne.s32.totalorder %s120, %s121
      %p135 = scmp.eq.s32.totalorder %s24, 1
      %p136 = por %p134, %p135
      %p138 = scmp.ne.s32.totalorder %s121, %s137
      %p139 = scmp.eq.s32.totalorder %s24, 0
      %p140 = por %p138, %p139
      %p141 = scmp.le.s32.totalorder 1, %s18
      %p142 = scmp.lt.s32.totalorder %s18, 3
      %p143 = pnand %p141, %p142
      %p144 = pneg %p143
      // Predicated region
      $region9: #{tpu_custom_call.1} parent=5 // pred_check
        _
      $region10: #{tpu_custom_call.1} parent=5 // pred_check_branch
        %146 = sbr.rel (%p143) target = $region12
      $region11: #{tpu_custom_call.1} parent=5 // pred_region
        %s147 = ssub.s32 %s18, 1
        // Predicated region
        $region13: #{tpu_custom_call.1} parent=11 // pred_check
          %p148 = pneg %p65
        $region14: #{tpu_custom_call.1} parent=11 // pred_check_branch
          %150 = sbr.rel (%p148) target = $region16
        $region15: #{tpu_custom_call.1} parent=11 // pred_region
          %152 = vsyncadd [#allocation9], 0
          %s153 = sshll.u32 %s1, 4
          %s154 = int_to_ptr.hbm [resolvable:$true] %s153
          %s155 = sshll.u32 [#allocation8], 4
          %s156 = int_to_ptr.vmem [resolvable:$true] %s155
          %161 = dma.hbm_to_vmem [thread:$0]  %s154, 320, %s156, [#allocation9], 64, 64, 4
        $region16: #{tpu_custom_call.1} parent=11 // pred_fallthru
          _
        // Predicated region
        $region17: #{tpu_custom_call.1} parent=11 // pred_check
          %p162 = pneg %p86
        $region18: #{tpu_custom_call.1} parent=11 // pred_check_branch
          %164 = sbr.rel (%p162) target = $region20
        $region19: #{tpu_custom_call.1} parent=11 // pred_region
          %166 = vsyncadd [#allocation9], 0
          %s167 = sshll.u32 %s2, 4
          %s168 = int_to_ptr.hbm [resolvable:$true] %s167
          %s169 = sshll.u32 [#allocation10], 4
          %s170 = int_to_ptr.vmem [resolvable:$true] %s169
          %175 = dma.hbm_to_vmem [thread:$0]  %s168, 320, %s170, [#allocation9], 64, 64, 4
        $region20: #{tpu_custom_call.1} parent=11 // pred_fallthru
          _
        // Predicated region
        $region21: #{tpu_custom_call.1} parent=11 // pred_check
          %p176 = pneg %p107
        $region22: #{tpu_custom_call.1} parent=11 // pred_check_branch
          %178 = sbr.rel (%p176) target = $region24
        $region23: #{tpu_custom_call.1} parent=11 // pred_region
          %180 = vsyncadd [#allocation12], 0
          %s181 = sshll.u32 %s3, 4
          %s182 = int_to_ptr.hbm [resolvable:$true] %s181
          %s183 = sshll.u32 [#allocation11], 4
          %s184 = int_to_ptr.vmem [resolvable:$true] %s183
          %189 = dma.hbm_to_vmem [thread:$0]  %s182, 320, %s184, [#allocation12], 64, 64, 4
        $region24: #{tpu_custom_call.1} parent=11 // pred_fallthru
          _
      $region12: #{tpu_custom_call.1} parent=5 // pred_fallthru
        _
      %p190 = scmp.lt.s32.totalorder %s18, 2
      // Predicated region
      $region25: #{tpu_custom_call.1} parent=5 // pred_check
        %p191 = pneg %p190
      $region26: #{tpu_custom_call.1} parent=5 // pred_check_branch
        %193 = sbr.rel (%p191) target = $region28
      $region27: #{tpu_custom_call.1} parent=5 // pred_region
        // Predicated region
        $region29: #{tpu_custom_call.1} parent=27 // pred_check
          %p194 = pneg %p38
        $region30: #{tpu_custom_call.1} parent=27 // pred_check_branch
          %196 = sbr.rel (%p194) target = $region32
        $region31: #{tpu_custom_call.1} parent=27 // pred_region
          %s197 = sand.u32 %s28, 1
          %s198 = scalar_lea.sflag [#allocation6], %s197
          %s199 = sand.u32 %s28, 1
          %s200 = smul.addr %s199, 8
          %s201 = scalar_lea.vmem [#allocation5], %s200
          %203 = vsyncadd %s198, 0
          %s204 = smul.addr %s18, 4
          %s205 = smul.addr %s204, 2
          %s206 = scalar_lea.hbm %s0, %s205
          %s208 = sshll.u32 %s206, 4
          %s209 = int_to_ptr.hbm [resolvable:$true] %s208
          %s210 = sshll.u32 %s201, 4
          %s211 = int_to_ptr.vmem [resolvable:$true] %s210
          %213 = dma.hbm_to_vmem [thread:$0]  %s209, 128, %s211, %s198
        $region32: #{tpu_custom_call.1} parent=27 // pred_fallthru
          _
      $region28: #{tpu_custom_call.1} parent=5 // pred_fallthru
        _
      %p214 = scmp.le.s32.totalorder 1, %s18
      %p215 = scmp.lt.s32.totalorder %s18, 3
      %p216 = pnand %p214, %p215
      %p217 = pneg %p216
      // Predicated region
      $region33: #{tpu_custom_call.1} parent=5 // pred_check
        _
      $region34: #{tpu_custom_call.1} parent=5 // pred_check_branch
        %219 = sbr.rel (%p216) target = $region36
      $region35: #{tpu_custom_call.1} parent=5 // pred_region
        %s220 = ssub.s32 %s18, 1
        %s221 = sand.u32 %s31, 1
        %s222 = scalar_lea.sflag [#allocation6], %s221
        %s223 = sand.u32 %s31, 1
        %s224 = smul.addr %s223, 8
        %s225 = scalar_lea.vmem [#allocation5], %s224
        // Predicated region
        $region37: #{tpu_custom_call.1} parent=35 // pred_check
          %p226 = pneg %p44
        $region38: #{tpu_custom_call.1} parent=35 // pred_check_branch
          %228 = sbr.rel (%p226) target = $region40
        $region39: #{tpu_custom_call.1} parent=35 // pred_region
          %230 = dma.done %s222, 128
        $region40: #{tpu_custom_call.1} parent=35 // pred_fallthru
          _
        // Predicated region
        $region41: #{tpu_custom_call.1} parent=35 // pred_check
          %p231 = pneg %p65
        $region42: #{tpu_custom_call.1} parent=35 // pred_check_branch
          %233 = sbr.rel (%p231) target = $region44
        $region43: #{tpu_custom_call.1} parent=35 // pred_region
          %235 = dma.done [#allocation9], 320
        $region44: #{tpu_custom_call.1} parent=35 // pred_fallthru
          _
        // Predicated region
        $region45: #{tpu_custom_call.1} parent=35 // pred_check
          %p236 = pneg %p86
        $region46: #{tpu_custom_call.1} parent=35 // pred_check_branch
          %238 = sbr.rel (%p236) target = $region48
        $region47: #{tpu_custom_call.1} parent=35 // pred_region
          %240 = dma.done [#allocation9], 320
        $region48: #{tpu_custom_call.1} parent=35 // pred_fallthru
          _
        // Predicated region
        $region49: #{tpu_custom_call.1} parent=35 // pred_check
          %p241 = pneg %p107
        $region50: #{tpu_custom_call.1} parent=35 // pred_check_branch
          %243 = sbr.rel (%p241) target = $region52
        $region51: #{tpu_custom_call.1} parent=35 // pred_region
          %245 = dma.done [#allocation12], 320
        $region52: #{tpu_custom_call.1} parent=35 // pred_fallthru
          _
        %s246 = sand.u32 %s31, 1
        %s247 = scalar_lea.sflag [#allocation6], %s246
        %s248 = sand.u32 %s31, 1
        %s249 = smul.addr %s248, 8
        %s250 = scalar_lea.vmem [#allocation5], %s249
        %p251 = pneg %p44
        %p252 = pneg %p41
        %p253 = pneg %p65
        %p254 = pneg %p62
        %p255 = pneg %p86
        %p256 = pneg %p83
        %p257 = pneg %p107
        %p258 = pneg %p104
        %p259 = pneg %p133
        %p260 = pneg %p130
        %s261 = sand.u32 %s120, 1
        %s262 = scalar_lea.sflag [#allocation7], %s261
        %s263 = sand.u32 %s120, 1
        %s264 = smul.addr %s263, 24
        %s265 = scalar_lea.vmem [#allocation13], %s264
        %267 = vst [vmem:[#allocation2] sm:$0xf] 0
        %vm268 = vcmask 1043968
        %269 = vst.msk [vmem:[#allocation2 + $0xc] sm:$0xf] %vm268, 0
        %270 = vst [vmem:[#allocation3] sm:$0xf] 0
        %271 = vst.msk [vmem:[#allocation3 + $0xc] sm:$0xf] %vm268, 0
        %v272 = vlaneseq
        %v273 = vand.u32 %v272, 127
        %v274 = vadd.s32 %v273, 128
        %v275 = vadd.s32 %v273, 256
        %vm276 = vcmp.lt.s32.totalorder %v273, 0
        %v277 = vsub.s32 0, %v273
        %v278 = vsel %vm276, %v277, %v273
        %v279 = vand.u32 %v278, 65535
        %v280 = vshrl.u32 %v278, 16
        %v282 = vmul.u32 %v279, 52429
        %v283 = vmul.u32 %v279, 52428
        %v284 = vmul.u32 %v280, 52429
        %v285 = vmul.u32 %v280, 52428
        %v286 = vshll.u32 %v283, 16
        %v287 = vshrl.u32 %v283, 16
        %v288 = vshll.u32 %v284, 16
        %v289 = vshrl.u32 %v284, 16
        %vm290 = vc.u32 %v282, %v286
        %v291 = vsel %vm290, 1, 0
        %v292 = vadd.s32 %v282, %v286
        %v293 = vadd.s32 %v285, %v291
        %vm294 = vc.u32 %v292, %v288
        %v295 = vsel %vm294, 1, 0
        %v296 = vadd.s32 %v292, %v288
        %v297 = vadd.s32 %v293, %v295
        %v298 = vadd.s32 %v297, %v287
        %v299 = vadd.s32 %v298, %v289
        %v300 = vshrl.u32 %v299, 4
        %v301 = vmul.u32 %v300, 20
        %v302 = vsub.s32 %v278, %v301
        %v303 = vsub.s32 0, %v302
        %v304 = vsel %vm276, %v303, %v302
        %vm305 = vcmp.lt.s32.totalorder %v274, 0
        %v306 = vsub.s32 0, %v274
        %v307 = vsel %vm305, %v306, %v274
        %v308 = vand.u32 %v307, 65535
        %v309 = vshrl.u32 %v307, 16
        %v311 = vmul.u32 %v308, 52429
        %v312 = vmul.u32 %v308, 52428
        %v313 = vmul.u32 %v309, 52429
        %v314 = vmul.u32 %v309, 52428
        %v315 = vshll.u32 %v312, 16
        %v316 = vshrl.u32 %v312, 16
        %v317 = vshll.u32 %v313, 16
        %v318 = vshrl.u32 %v313, 16
        %vm319 = vc.u32 %v311, %v315
        %v320 = vsel %vm319, 1, 0
        %v321 = vadd.s32 %v311, %v315
        %v322 = vadd.s32 %v314, %v320
        %vm323 = vc.u32 %v321, %v317
        %v324 = vsel %vm323, 1, 0
        %v325 = vadd.s32 %v321, %v317
        %v326 = vadd.s32 %v322, %v324
        %v327 = vadd.s32 %v326, %v316
        %v328 = vadd.s32 %v327, %v318
        %v329 = vshrl.u32 %v328, 4
        %v330 = vmul.u32 %v329, 20
        %v331 = vsub.s32 %v307, %v330
        %v332 = vsub.s32 0, %v331
        %v333 = vsel %vm305, %v332, %v331
        %vm334 = vcmp.lt.s32.totalorder %v275, 0
        %v335 = vsub.s32 0, %v275
        %v336 = vsel %vm334, %v335, %v275
        %v337 = vand.u32 %v336, 65535
        %v338 = vshrl.u32 %v336, 16
        %v340 = vmul.u32 %v337, 52429
        %v341 = vmul.u32 %v337, 52428
        %v342 = vmul.u32 %v338, 52429
        %v343 = vmul.u32 %v338, 52428
        %v344 = vshll.u32 %v341, 16
        %v345 = vshrl.u32 %v341, 16
        %v346 = vshll.u32 %v342, 16
        %v347 = vshrl.u32 %v342, 16
        %vm348 = vc.u32 %v340, %v344
        %v349 = vsel %vm348, 1, 0
        %v350 = vadd.s32 %v340, %v344
        %v351 = vadd.s32 %v343, %v349
        %vm352 = vc.u32 %v350, %v346
        %v353 = vsel %vm352, 1, 0
        %v354 = vadd.s32 %v350, %v346
        %v355 = vadd.s32 %v351, %v353
        %v356 = vadd.s32 %v355, %v345
        %v357 = vadd.s32 %v356, %v347
        %v358 = vshrl.u32 %v357, 4
        %v359 = vmul.u32 %v358, 20
        %v360 = vsub.s32 %v336, %v359
        %v361 = vsub.s32 0, %v360
        %v362 = vsel %vm334, %v361, %v360
        %vm363 = vcmp.ne.s32.totalorder %v304, 0
        %vm364 = vcmp.ne.s32.totalorder %v333, 0
        %vm365 = vcmp.ne.s32.totalorder %v362, 0
        %vm366 = vcmp.lt.s32.totalorder %v304, 0
        %vm367 = vcmp.lt.s32.totalorder %v333, 0
        %vm368 = vcmp.lt.s32.totalorder %v362, 0
        %vm369 = vmand %vm366, %vm363
        %vm370 = vmand %vm367, %vm364
        %vm371 = vmand %vm368, %vm365
        %v372 = vadd.s32 %v304, 20
        %v373 = vadd.s32 %v333, 20
        %v374 = vadd.s32 %v362, 20
        %v375 = vsel %vm369, %v372, %v304
        %v376 = vsel %vm370, %v373, %v333
        %v377 = vsel %vm371, %v374, %v362
        %vm378 = vcmp.lt.s32.totalorder %v375, 16
        %vm379 = vcmp.lt.s32.totalorder %v376, 16
        %vm380 = vcmp.lt.s32.totalorder %v377, 16
        %v381 = vld [vmem:[%s225] sm:$0xff]
        %383 = vst [vmem:[#allocation1] ss:$2 sm:$0xff] %v381
        %v384 = vld.sshfl [vmem:[#allocation1] sm:$0xff pattern:$0x75643120]
        %v386 = vld.sshfl [vmem:[#allocation1 + $0x8] sm:$0xff pattern:$0x75643120]
        %388 = vrot.lane.b32.xlu0 %v384, 42
        %v389 = vpop.permute.xlu0 %388
        %390 = vrot.lane.b32.xlu0 %v386, 42
        %v391 = vpop.permute.xlu0 %390
        %v392 = vrot.slane %v389, 4
        %v393 = vrot.slane %v391, 4
        %vm394 = vcmask 1043456
        %v395 = vsel %vm394, %v392, %v393
        %vm396 = vcmask 343040
        %v397 = vsel %vm396, %v389, %v395
        %v398 = vsel %vm396, %v391, %v393
        %401 = vst [vmem:[#allocation4] sm:$0x33] %v397
        %vm402 = vcmask 549888
        %403 = vst.msk [vmem:[#allocation4 + $0x8] sm:$0x3] %vm402, %v398
        %s404 = scalar_lea.vmem [#allocation1], 1
        %405 = vst [vmem:[%s404] ss:$2 sm:$0xff] %v381
        %v406 = vld.sshfl [vmem:[#allocation1] sm:$0xff pattern:$0x75643120]
        %v408 = vld.sshfl [vmem:[#allocation1 + $0x8] sm:$0xff pattern:$0x75643120]
        %410 = vrot.lane.b32.xlu0 %v406, 22
        %v411 = vpop.permute.xlu0 %410
        %412 = vrot.lane.b32.xlu0 %v408, 22
        %v413 = vpop.permute.xlu0 %412
        %v414 = vrot.slane %v411, 4
        %v415 = vrot.slane %v413, 4
        %v416 = vsel %vm394, %v414, %v415
        %vm417 = vcmask 179200
        %v418 = vsel %vm417, %v411, %v416
        %v419 = vsel %vm417, %v413, %v415
        %422 = vst [vmem:[#allocation4] sm:$0xcc] %v418
        %vm423 = vcmask 551938
        %424 = vst.msk [vmem:[#allocation4 + $0x8] sm:$0xc] %vm423, %v419
        %425 = vst [vmem:[#allocation1] ss:$2 sm:$0xff] %v381
        %v426 = vld.sshfl [vmem:[#allocation1] sm:$0xff pattern:$0x75643120]
        %v428 = vld.sshfl [vmem:[#allocation1 + $0x8] sm:$0xff pattern:$0x75643120]
        %430 = vrot.lane.b32.xlu0 %v426, 2
        %v431 = vpop.permute.xlu0 %430
        %432 = vrot.lane.b32.xlu0 %v428, 2
        %v433 = vpop.permute.xlu0 %432
        %v434 = vrot.slane %v431, 4
        %v435 = vrot.slane %v433, 4
        %v436 = vsel %vm394, %v434, %v435
        %vm437 = vcmask 15360
        %v438 = vsel %vm437, %v431, %v436
        %v439 = vsel %vm437, %v433, %v435
        %442 = vst [vmem:[#allocation4 + $0xc] sm:$0x33] %v438
        %443 = vst.msk [vmem:[#allocation4 + $0x14] sm:$0x3] %vm402, %v439
        %s444 = scalar_lea.vmem [#allocation1], 1
        %445 = vst [vmem:[%s444] ss:$2 sm:$0xff] %v381
        %v446 = vld.sshfl [vmem:[#allocation1] sm:$0xff pattern:$0x75643120]
        %v448 = vld.sshfl [vmem:[#allocation1 + $0x8] sm:$0xff pattern:$0x75643120]
        %450 = vrot.lane.b32.xlu0 %v446, 110
        %v451 = vpop.permute.xlu0 %450
        %452 = vrot.lane.b32.xlu0 %v448, 110
        %v453 = vpop.permute.xlu0 %452
        %v454 = vrot.slane %v451, 4
        %v455 = vrot.slane %v453, 4
        %v456 = vsel %vm394, %v454, %v455
        %vm457 = vcmask 900096
        %v458 = vsel %vm457, %v456, %v453
        %461 = vst [vmem:[#allocation4 + $0xc] sm:$0xcc] %v458
        %462 = vst.msk [vmem:[#allocation4 + $0x14] sm:$0xc] %vm423, %v455
        %463 = vst [vmem:[#allocation1] ss:$2 sm:$0xff] %v381
        %v464 = vld.sshfl [vmem:[#allocation1] sm:$0xff pattern:$0x75643120]
        %v466 = vld.sshfl [vmem:[#allocation1 + $0x8] sm:$0xff pattern:$0x75643120]
        %468 = vrot.lane.b32.xlu0 %v464, 90
        %v469 = vpop.permute.xlu0 %468
        %470 = vrot.lane.b32.xlu0 %v466, 90
        %v471 = vpop.permute.xlu0 %470
        %v472 = vrot.slane %v469, 4
        %v473 = vrot.slane %v471, 4
        %v474 = vsel %vm394, %v472, %v473
        %vm475 = vcmask 736256
        %v476 = vsel %vm475, %v474, %v471
        %479 = vst [vmem:[#allocation4 + $0x18] sm:$0x33] %v476
        %480 = vst.msk [vmem:[#allocation4 + $0x20] sm:$0x3] %vm402, %v473
        %v481 = vld [vmem:[#allocation8] sm:$0xf]
        %v482 = vld [vmem:[#allocation4] sm:$0xff]
        %v483 = vld [vmem:[#allocation4 + $0x8] sm:$0xf]
        %v484 = vld [vmem:[#allocation4 + $0xc] sm:$0xff]
        %v485 = vld [vmem:[#allocation4 + $0x14] sm:$0xf]
        %v486 = vld [vmem:[#allocation4 + $0x18] sm:$0x33]
        %v487 = vld [vmem:[#allocation4 + $0x20] sm:$0x3]
        %s488 = scalar_lea.vmem [#allocation8], 4
        %v489 = vld [vmem:[%s488] sm:$0xf]
        %v496 = vunpack.c.l.b16 %v482
        %v497 = vunpack.c.h.b16 %v482
        %v498 = vunpack.c.l.b16 %v483
        %v499 = vunpack.c.l.b16 %v484
        %v500 = vunpack.c.h.b16 %v484
        %v501 = vunpack.c.l.b16 %v485
        %v502 = vunpack.c.l.b16 %v486
        %v503 = vunpack.c.h.b16 %v486
        %v504 = vunpack.c.l.b16 %v487
        %v505 = vpack.c.b16 %v499, %v496
        %v506 = vpack.c.b16 %v500, %v497
        %v507 = vpack.c.b16 %v501, %v498
        %v508 = vpack.c.b16 %v502, %v502
        %v509 = vpack.c.b16 %v503, %v503
        %v510 = vpack.c.b16 %v504, %v504
        %511 = vrot.lane.b32.xlu0 %v505, 127
        %v512 = vpop.permute.xlu0 %511
        %513 = vrot.lane.b32.xlu0 %v506, 127
        %v514 = vpop.permute.xlu0 %513
        %515 = vrot.lane.b32.xlu0 %v507, 127
        %v516 = vpop.permute.xlu0 %515
        %517 = vrot.lane.b32.xlu0 %v508, 127
        %v518 = vpop.permute.xlu0 %517
        %519 = vrot.lane.b32.xlu0 %v509, 127
        %v520 = vpop.permute.xlu0 %519
        %521 = vrot.lane.b32.xlu0 %v510, 127
        %v522 = vpop.permute.xlu0 %521
        %vm523 = vcmask 1039360
        %v524 = vsel %vm523, %v512, %v514
        %v525 = vsel %vm523, %v514, %v516
        %v526 = vsel %vm523, %v518, %v520
        %v527 = vsel %vm523, %v520, %v522
        %vm531 = vcmask 162816
        %v533 = vsel %vm531, %v489, 0
        %vm535 = vcmask 1041408
        %v537 = vsel %vm535, %v526, 0
        %v540 = vsel %vm535, %v527, 0
        %v543 = vsel %vm535, %v522, 0
        %545 = vmatpush.bf16.msra.mxu0 0
        %546 = vmatpush.bf16.msra.mxu0 0
        %547 = vmatpush.bf16.msra.mxu0 0
        %548 = vmatpush.bf16.msra.mxu0 0
        %549 = vmatpush.bf16.msra.mxu0 0
        %550 = vmatpush.bf16.msra.mxu0 0
        %551 = vmatpush.bf16.msra.mxu0 %v537
        %552 = vmatpush.bf16.msra.mxu0 %v524
        %553 = vmatmul.bf16.gmra.mxu0 %v533
        %v554 = vpop.f32.mrf.mxu0
        %v555 = vadd.f32 0.0, %v554
        %v556 = vpop.f32.mrf.mxu0
        %557 = vdwg.mxu0
        %558 = vmatpush.bf16.msra.mxu0 0
        %559 = vmatpush.bf16.msra.mxu0 0
        %560 = vmatpush.bf16.msra.mxu0 0
        %561 = vmatpush.bf16.msra.mxu0 0
        %562 = vmatpush.bf16.msra.mxu0 0
        %563 = vmatpush.bf16.msra.mxu0 0
        %564 = vmatpush.bf16.msra.mxu0 %v540
        %565 = vmatpush.bf16.msra.mxu0 %v525
        %566 = vmatmul.bf16.gmra.mxu0 %v533
        %v567 = vpop.f32.mrf.mxu0
        %v568 = vadd.f32 0.0, %v567
        %v569 = vpop.f32.mrf.mxu0
        %570 = vdwg.mxu0
        %571 = vmatpush.bf16.msra.mxu0 0
        %572 = vmatpush.bf16.msra.mxu0 0
        %573 = vmatpush.bf16.msra.mxu0 0
        %574 = vmatpush.bf16.msra.mxu0 0
        %575 = vmatpush.bf16.msra.mxu0 0
        %576 = vmatpush.bf16.msra.mxu0 0
        %577 = vmatpush.bf16.msra.mxu0 %v543
        %578 = vmatpush.bf16.msra.mxu0 %v516
        %579 = vmatmul.bf16.gmra.mxu0 %v533
        %v580 = vpop.f32.mrf.mxu0
        %v581 = vadd.f32 0.0, %v580
        %v582 = vpop.f32.mrf.mxu0
        %583 = vdwg.mxu0
        %v588 = vsel %vm531, %v481, 0
        %v591 = vsel %vm535, %v508, 0
        %v594 = vsel %vm535, %v509, 0
        %v597 = vsel %vm535, %v510, 0
        %599 = vmatpush.bf16.msra.mxu0 0
        %600 = vmatpush.bf16.msra.mxu0 0
        %601 = vmatpush.bf16.msra.mxu0 0
        %602 = vmatpush.bf16.msra.mxu0 0
        %603 = vmatpush.bf16.msra.mxu0 0
        %604 = vmatpush.bf16.msra.mxu0 0
        %605 = vmatpush.bf16.msra.mxu0 %v591
        %606 = vmatpush.bf16.msra.mxu0 %v505
        %607 = vmatmul.bf16.gmra.mxu0 %v588
        %v608 = vpop.f32.mrf.mxu0
        %v609 = vadd.f32 %v555, %v608
        %v610 = vpop.f32.mrf.mxu0
        %611 = vdwg.mxu0
        %612 = vmatpush.bf16.msra.mxu0 0
        %613 = vmatpush.bf16.msra.mxu0 0
        %614 = vmatpush.bf16.msra.mxu0 0
        %615 = vmatpush.bf16.msra.mxu0 0
        %616 = vmatpush.bf16.msra.mxu0 0
        %617 = vmatpush.bf16.msra.mxu0 0
        %618 = vmatpush.bf16.msra.mxu0 %v594
        %619 = vmatpush.bf16.msra.mxu0 %v506
        %620 = vmatmul.bf16.gmra.mxu0 %v588
        %v621 = vpop.f32.mrf.mxu0
        %v622 = vadd.f32 %v568, %v621
        %v623 = vpop.f32.mrf.mxu0
        %624 = vdwg.mxu0
        %625 = vmatpush.bf16.msra.mxu0 0
        %626 = vmatpush.bf16.msra.mxu0 0
        %627 = vmatpush.bf16.msra.mxu0 0
        %628 = vmatpush.bf16.msra.mxu0 0
        %629 = vmatpush.bf16.msra.mxu0 0
        %630 = vmatpush.bf16.msra.mxu0 0
        %631 = vmatpush.bf16.msra.mxu0 %v597
        %632 = vmatpush.bf16.msra.mxu0 %v507
        %633 = vmatmul.bf16.gmra.mxu0 %v588
        %v634 = vpop.f32.mrf.mxu0
        %v635 = vadd.f32 %v581, %v634
        %v636 = vpop.f32.mrf.mxu0
        %637 = vdwg.mxu0
        %s638 = scalar_lea.vmem [#allocation8], 8
        %v639 = vld [vmem:[%s638] sm:$0xf]
        %640 = vrot.lane.b32.xlu0 %v505, 126
        %v641 = vpop.permute.xlu0 %640
        %642 = vrot.lane.b32.xlu0 %v506, 126
        %v643 = vpop.permute.xlu0 %642
        %644 = vrot.lane.b32.xlu0 %v507, 126
        %v645 = vpop.permute.xlu0 %644
        %646 = vrot.lane.b32.xlu0 %v508, 126
        %v647 = vpop.permute.xlu0 %646
        %648 = vrot.lane.b32.xlu0 %v509, 126
        %v649 = vpop.permute.xlu0 %648
        %650 = vrot.lane.b32.xlu0 %v510, 126
        %v651 = vpop.permute.xlu0 %650
        %vm652 = vcmask 1031168
        %v653 = vsel %vm652, %v641, %v643
        %v654 = vsel %vm652, %v643, %v645
        %v655 = vsel %vm652, %v647, %v649
        %v656 = vsel %vm652, %v649, %v651
        %v661 = vsel %vm531, %v639, 0
        %v664 = vsel %vm535, %v655, 0
        %v667 = vsel %vm535, %v656, 0
        %v670 = vsel %vm535, %v651, 0
        %672 = vmatpush.bf16.msra.mxu0 0
        %673 = vmatpush.bf16.msra.mxu0 0
        %674 = vmatpush.bf16.msra.mxu0 0
        %675 = vmatpush.bf16.msra.mxu0 0
        %676 = vmatpush.bf16.msra.mxu0 0
        %677 = vmatpush.bf16.msra.mxu0 0
        %678 = vmatpush.bf16.msra.mxu0 %v664
        %679 = vmatpush.bf16.msra.mxu0 %v653
        %680 = vmatmul.bf16.gmra.mxu0 %v661
        %v681 = vpop.f32.mrf.mxu0
        %v682 = vadd.f32 0.0, %v681
        %v683 = vpop.f32.mrf.mxu0
        %684 = vdwg.mxu0
        %685 = vmatpush.bf16.msra.mxu0 0
        %686 = vmatpush.bf16.msra.mxu0 0
        %687 = vmatpush.bf16.msra.mxu0 0
        %688 = vmatpush.bf16.msra.mxu0 0
        %689 = vmatpush.bf16.msra.mxu0 0
        %690 = vmatpush.bf16.msra.mxu0 0
        %691 = vmatpush.bf16.msra.mxu0 %v667
        %692 = vmatpush.bf16.msra.mxu0 %v654
        %693 = vmatmul.bf16.gmra.mxu0 %v661
        %v694 = vpop.f32.mrf.mxu0
        %v695 = vadd.f32 0.0, %v694
        %v696 = vpop.f32.mrf.mxu0
        %697 = vdwg.mxu0
        %698 = vmatpush.bf16.msra.mxu0 0
        %699 = vmatpush.bf16.msra.mxu0 0
        %700 = vmatpush.bf16.msra.mxu0 0
        %701 = vmatpush.bf16.msra.mxu0 0
        %702 = vmatpush.bf16.msra.mxu0 0
        %703 = vmatpush.bf16.msra.mxu0 0
        %704 = vmatpush.bf16.msra.mxu0 %v670
        %705 = vmatpush.bf16.msra.mxu0 %v645
        %706 = vmatmul.bf16.gmra.mxu0 %v661
        %v707 = vpop.f32.mrf.mxu0
        %v708 = vadd.f32 0.0, %v707
        %v709 = vpop.f32.mrf.mxu0
        %710 = vdwg.mxu0
        %v711 = vadd.f32 %v609, %v682
        %v712 = vadd.f32 %v622, %v695
        %v713 = vadd.f32 %v635, %v708
        %s714 = scalar_lea.vmem [#allocation8], 12
        %v715 = vld [vmem:[%s714] sm:$0xf]
        %716 = vrot.lane.b32.xlu0 %v505, 125
        %v717 = vpop.permute.xlu0 %716
        %718 = vrot.lane.b32.xlu0 %v506, 125
        %v719 = vpop.permute.xlu0 %718
        %720 = vrot.lane.b32.xlu0 %v507, 125
        %v721 = vpop.permute.xlu0 %720
        %722 = vrot.lane.b32.xlu0 %v508, 125
        %v723 = vpop.permute.xlu0 %722
        %724 = vrot.lane.b32.xlu0 %v509, 125
        %v725 = vpop.permute.xlu0 %724
        %726 = vrot.lane.b32.xlu0 %v510, 125
        %v727 = vpop.permute.xlu0 %726
        %vm728 = vcmask 1022976
        %v729 = vsel %vm728, %v717, %v719
        %v730 = vsel %vm728, %v719, %v721
        %v731 = vsel %vm728, %v723, %v725
        %v732 = vsel %vm728, %v725, %v727
        %v737 = vsel %vm531, %v715, 0
        %v740 = vsel %vm535, %v731, 0
        %v743 = vsel %vm535, %v732, 0
        %v746 = vsel %vm535, %v727, 0
        %748 = vmatpush.bf16.msra.mxu0 0
        %749 = vmatpush.bf16.msra.mxu0 0
        %750 = vmatpush.bf16.msra.mxu0 0
        %751 = vmatpush.bf16.msra.mxu0 0
        %752 = vmatpush.bf16.msra.mxu0 0
        %753 = vmatpush.bf16.msra.mxu0 0
        %754 = vmatpush.bf16.msra.mxu0 %v740
        %755 = vmatpush.bf16.msra.mxu0 %v729
        %756 = vmatmul.bf16.gmra.mxu0 %v737
        %v757 = vpop.f32.mrf.mxu0
        %v758 = vadd.f32 0.0, %v757
        %v759 = vpop.f32.mrf.mxu0
        %760 = vdwg.mxu0
        %761 = vmatpush.bf16.msra.mxu0 0
        %762 = vmatpush.bf16.msra.mxu0 0
        %763 = vmatpush.bf16.msra.mxu0 0
        %764 = vmatpush.bf16.msra.mxu0 0
        %765 = vmatpush.bf16.msra.mxu0 0
        %766 = vmatpush.bf16.msra.mxu0 0
        %767 = vmatpush.bf16.msra.mxu0 %v743
        %768 = vmatpush.bf16.msra.mxu0 %v730
        %769 = vmatmul.bf16.gmra.mxu0 %v737
        %v770 = vpop.f32.mrf.mxu0
        %v771 = vadd.f32 0.0, %v770
        %v772 = vpop.f32.mrf.mxu0
        %773 = vdwg.mxu0
        %774 = vmatpush.bf16.msra.mxu0 0
        %775 = vmatpush.bf16.msra.mxu0 0
        %776 = vmatpush.bf16.msra.mxu0 0
        %777 = vmatpush.bf16.msra.mxu0 0
        %778 = vmatpush.bf16.msra.mxu0 0
        %779 = vmatpush.bf16.msra.mxu0 0
        %780 = vmatpush.bf16.msra.mxu0 %v746
        %781 = vmatpush.bf16.msra.mxu0 %v721
        %782 = vmatmul.bf16.gmra.mxu0 %v737
        %v783 = vpop.f32.mrf.mxu0
        %v784 = vadd.f32 0.0, %v783
        %v785 = vpop.f32.mrf.mxu0
        %786 = vdwg.mxu0
        %v787 = vadd.f32 %v711, %v758
        %v788 = vadd.f32 %v712, %v771
        %v789 = vadd.f32 %v713, %v784
        %s790 = scalar_lea.vmem [#allocation8], 16
        %v791 = vld [vmem:[%s790] sm:$0xf]
        %792 = vrot.lane.b32.xlu0 %v505, 124
        %v793 = vpop.permute.xlu0 %792
        %794 = vrot.lane.b32.xlu0 %v506, 124
        %v795 = vpop.permute.xlu0 %794
        %796 = vrot.lane.b32.xlu0 %v507, 124
        %v797 = vpop.permute.xlu0 %796
        %798 = vrot.lane.b32.xlu0 %v508, 124
        %v799 = vpop.permute.xlu0 %798
        %800 = vrot.lane.b32.xlu0 %v509, 124
        %v801 = vpop.permute.xlu0 %800
        %802 = vrot.lane.b32.xlu0 %v510, 124
        %v803 = vpop.permute.xlu0 %802
        %vm804 = vcmask 1014784
        %v805 = vsel %vm804, %v793, %v795
        %v806 = vsel %vm804, %v795, %v797
        %v807 = vsel %vm804, %v799, %v801
        %v808 = vsel %vm804, %v801, %v803
        %v813 = vsel %vm531, %v791, 0
        %v816 = vsel %vm535, %v807, 0
        %v819 = vsel %vm535, %v808, 0
        %v822 = vsel %vm535, %v803, 0
        %824 = vmatpush.bf16.msra.mxu0 0
        %825 = vmatpush.bf16.msra.mxu0 0
        %826 = vmatpush.bf16.msra.mxu0 0
        %827 = vmatpush.bf16.msra.mxu0 0
        %828 = vmatpush.bf16.msra.mxu0 0
        %829 = vmatpush.bf16.msra.mxu0 0
        %830 = vmatpush.bf16.msra.mxu0 %v816
        %831 = vmatpush.bf16.msra.mxu0 %v805
        %832 = vmatmul.bf16.gmra.mxu0 %v813
        %v833 = vpop.f32.mrf.mxu0
        %v834 = vadd.f32 0.0, %v833
        %v835 = vpop.f32.mrf.mxu0
        %836 = vdwg.mxu0
        %837 = vmatpush.bf16.msra.mxu0 0
        %838 = vmatpush.bf16.msra.mxu0 0
        %839 = vmatpush.bf16.msra.mxu0 0
        %840 = vmatpush.bf16.msra.mxu0 0
        %841 = vmatpush.bf16.msra.mxu0 0
        %842 = vmatpush.bf16.msra.mxu0 0
        %843 = vmatpush.bf16.msra.mxu0 %v819
        %844 = vmatpush.bf16.msra.mxu0 %v806
        %845 = vmatmul.bf16.gmra.mxu0 %v813
        %v846 = vpop.f32.mrf.mxu0
        %v847 = vadd.f32 0.0, %v846
        %v848 = vpop.f32.mrf.mxu0
        %849 = vdwg.mxu0
        %850 = vmatpush.bf16.msra.mxu0 0
        %851 = vmatpush.bf16.msra.mxu0 0
        %852 = vmatpush.bf16.msra.mxu0 0
        %853 = vmatpush.bf16.msra.mxu0 0
        %854 = vmatpush.bf16.msra.mxu0 0
        %855 = vmatpush.bf16.msra.mxu0 0
        %856 = vmatpush.bf16.msra.mxu0 %v822
        %857 = vmatpush.bf16.msra.mxu0 %v797
        %858 = vmatmul.bf16.gmra.mxu0 %v813
        %v859 = vpop.f32.mrf.mxu0
        %v860 = vadd.f32 0.0, %v859
        %v861 = vpop.f32.mrf.mxu0
        %862 = vdwg.mxu0
        %v863 = vadd.f32 %v787, %v834
        %v864 = vadd.f32 %v788, %v847
        %v865 = vadd.f32 %v789, %v860
        %v866 = vsel %vm378, 1, 0
        %v867 = vsel %vm379, 1, 0
        %v868 = vsel %vm380, 1, 0
        %vm869 = vcmp.eq.s32.totalorder %v866, 1
        %vm870 = vcmp.eq.s32.totalorder %v867, 1
        %vm871 = vcmp.eq.s32.totalorder %v868, 1
        %v872 = vsel %vm869, %v863, 0.0
        %v873 = vsel %vm870, %v864, 0.0
        %v874 = vsel %vm871, %v865, 0.0
        %v875 = vpack.c.bf16 %v873, %v872
        %v876 = vpack.c.bf16 %v874, %v874
        %877 = vst [vmem:[#allocation2 + $0x4] sm:$0xff] %v875
        %vm878 = vcmask 519168
        %879 = vst.msk [vmem:[#allocation2 + $0xc] sm:$0xf] %vm878, %v876
        %v880 = vld [vmem:[#allocation2] sm:$0xff]
        %v881 = vld [vmem:[#allocation2 + $0x8] sm:$0xff]
        %884 = vrot.lane.b32.xlu0 %v880, 42
        %v885 = vpop.permute.xlu0 %884
        %886 = vrot.lane.b32.xlu0 %v881, 42
        %v887 = vpop.permute.xlu0 %886
        %v888 = vrot.slane %v885, 4
        %v889 = vrot.slane %v887, 4
        %v890 = vsel %vm394, %v888, %v889
        %v891 = vsel %vm396, %v885, %v890
        %v892 = vsel %vm396, %v887, %v889
        %895 = vst [vmem:[#allocation4] sm:$0xff] %v891
        %vm896 = vcmask 551936
        %897 = vst.msk [vmem:[#allocation4 + $0x8] sm:$0xf] %vm896, %v892
        %v898 = vld [vmem:[#allocation2] sm:$0xff]
        %v899 = vld [vmem:[#allocation2 + $0x8] sm:$0xff]
        %902 = vrot.lane.b32.xlu0 %v898, 22
        %v903 = vpop.permute.xlu0 %902
        %904 = vrot.lane.b32.xlu0 %v899, 22
        %v905 = vpop.permute.xlu0 %904
        %v906 = vrot.slane %v903, 4
        %v907 = vrot.slane %v905, 4
        %v908 = vsel %vm394, %v906, %v907
        %v909 = vsel %vm417, %v903, %v908
        %v910 = vsel %vm417, %v905, %v907
        %913 = vst [vmem:[#allocation4 + $0xc] sm:$0xff] %v909
        %914 = vst.msk [vmem:[#allocation4 + $0x14] sm:$0xf] %vm896, %v910
        %v915 = vld [vmem:[#allocation2] sm:$0xff]
        %v916 = vld [vmem:[#allocation2 + $0x8] sm:$0xff]
        %919 = vrot.lane.b32.xlu0 %v915, 2
        %v920 = vpop.permute.xlu0 %919
        %921 = vrot.lane.b32.xlu0 %v916, 2
        %v922 = vpop.permute.xlu0 %921
        %v923 = vrot.slane %v920, 4
        %v924 = vrot.slane %v922, 4
        %v925 = vsel %vm394, %v923, %v924
        %v926 = vsel %vm437, %v920, %v925
        %v927 = vsel %vm437, %v922, %v924
        %930 = vst [vmem:[#allocation4 + $0x18] sm:$0xff] %v926
        %931 = vst.msk [vmem:[#allocation4 + $0x20] sm:$0xf] %vm896, %v927
        %v932 = vld [vmem:[#allocation2 + $0x4] sm:$0xff]
        %v933 = vld [vmem:[#allocation2 + $0xc] sm:$0xf]
        %936 = vrot.lane.b32.xlu0 %v932, 110
        %v937 = vpop.permute.xlu0 %936
        %938 = vrot.lane.b32.xlu0 %v933, 110
        %v939 = vpop.permute.xlu0 %938
        %v940 = vrot.slane %v937, 4
        %v941 = vrot.slane %v939, 4
        %v942 = vsel %vm394, %v940, %v941
        %v943 = vsel %vm457, %v937, %v942
        %946 = vst [vmem:[#allocation4 + $0x24] sm:$0xff] %v943
        %947 = vst.msk [vmem:[#allocation4 + $0x2c] sm:$0xf] %vm896, %v939
        %v948 = vld [vmem:[#allocation2 + $0x4] sm:$0xff]
        %v949 = vld [vmem:[#allocation2 + $0xc] sm:$0xf]
        %952 = vrot.lane.b32.xlu0 %v948, 90
        %v953 = vpop.permute.xlu0 %952
        %954 = vrot.lane.b32.xlu0 %v949, 90
        %v955 = vpop.permute.xlu0 %954
        %v956 = vrot.slane %v953, 4
        %v957 = vrot.slane %v955, 4
        %v958 = vsel %vm394, %v956, %v957
        %v959 = vsel %vm475, %v953, %v958
        %962 = vst [vmem:[#allocation4 + $0x30] sm:$0xff] %v959
        %963 = vst.msk [vmem:[#allocation4 + $0x38] sm:$0xf] %vm896, %v955
        %v964 = vld [vmem:[#allocation10] sm:$0xf]
        %v965 = vld [vmem:[#allocation4] sm:$0xff]
        %v966 = vld [vmem:[#allocation4 + $0x8] sm:$0xf]
        %v967 = vld [vmem:[#allocation4 + $0xc] sm:$0xff]
        %v968 = vld [vmem:[#allocation4 + $0x14] sm:$0xf]
        %v969 = vld [vmem:[#allocation4 + $0x18] sm:$0xff]
        %v970 = vld [vmem:[#allocation4 + $0x20] sm:$0xf]
        %v971 = vld [vmem:[#allocation4 + $0x24] sm:$0xff]
        %v972 = vld [vmem:[#allocation4 + $0x2c] sm:$0xf]
        %v973 = vld [vmem:[#allocation4 + $0x30] sm:$0xff]
        %v974 = vld [vmem:[#allocation4 + $0x38] sm:$0xf]
        %s975 = scalar_lea.vmem [#allocation10], 4
        %v976 = vld [vmem:[%s975] sm:$0xf]
        %v987 = vunpack.c.l.b16 %v965
        %v988 = vunpack.c.h.b16 %v965
        %v989 = vunpack.c.l.b16 %v966
        %v990 = vunpack.c.l.b16 %v967
        %v991 = vunpack.c.h.b16 %v967
        %v992 = vunpack.c.l.b16 %v968
        %v993 = vunpack.c.l.b16 %v969
        %v994 = vunpack.c.h.b16 %v969
        %v995 = vunpack.c.l.b16 %v970
        %v996 = vunpack.c.l.b16 %v971
        %v997 = vunpack.c.h.b16 %v971
        %v998 = vunpack.c.l.b16 %v972
        %v999 = vunpack.c.l.b16 %v973
        %v1000 = vunpack.c.h.b16 %v973
        %v1001 = vunpack.c.l.b16 %v974
        %v1002 = vpack.c.b16 %v990, %v987
        %v1003 = vpack.c.b16 %v991, %v988
        %v1004 = vpack.c.b16 %v992, %v989
        %v1005 = vpack.c.b16 %v996, %v993
        %v1006 = vpack.c.b16 %v997, %v994
        %v1007 = vpack.c.b16 %v998, %v995
        %v1008 = vpack.c.b16 %v999, %v999
        %v1009 = vpack.c.b16 %v1000, %v1000
        %v1010 = vpack.c.b16 %v1001, %v1001
        %1011 = vrot.lane.b32.xlu0 %v1002, 127
        %v1012 = vpop.permute.xlu0 %1011
        %1013 = vrot.lane.b32.xlu0 %v1003, 127
        %v1014 = vpop.permute.xlu0 %1013
        %1015 = vrot.lane.b32.xlu0 %v1004, 127
        %v1016 = vpop.permute.xlu0 %1015
        %1017 = vrot.lane.b32.xlu0 %v1005, 127
        %v1018 = vpop.permute.xlu0 %1017
        %1019 = vrot.lane.b32.xlu0 %v1006, 127
        %v1020 = vpop.permute.xlu0 %1019
        %1021 = vrot.lane.b32.xlu0 %v1007, 127
        %v1022 = vpop.permute.xlu0 %1021
        %1023 = vrot.lane.b32.xlu0 %v1008, 127
        %v1024 = vpop.permute.xlu0 %1023
        %1025 = vrot.lane.b32.xlu0 %v1009, 127
        %v1026 = vpop.permute.xlu0 %1025
        %1027 = vrot.lane.b32.xlu0 %v1010, 127
        %v1028 = vpop.permute.xlu0 %1027
        %v1029 = vsel %vm523, %v1012, %v1014
        %v1030 = vsel %vm523, %v1014, %v1016
        %v1031 = vsel %vm523, %v1018, %v1020
        %v1032 = vsel %vm523, %v1020, %v1022
        %v1033 = vsel %vm523, %v1024, %v1026
        %v1034 = vsel %vm523, %v1026, %v1028
        %vm1041 = vcmask 326656
        %v1043 = vsel %vm1041, %v976, 0
        %vm1045 = vcmask 1043456
        %v1047 = vsel %vm1045, %v1033, 0
        %v1050 = vsel %vm1045, %v1034, 0
        %v1053 = vsel %vm1045, %v1028, 0
        %1055 = vmatpush.bf16.msra.mxu0 0
        %1056 = vmatpush.bf16.msra.mxu0 0
        %1057 = vmatpush.bf16.msra.mxu0 0
        %1058 = vmatpush.bf16.msra.mxu0 0
        %1059 = vmatpush.bf16.msra.mxu0 0
        %1060 = vmatpush.bf16.msra.mxu0 %v1047
        %1061 = vmatpush.bf16.msra.mxu0 %v1031
        %1062 = vmatpush.bf16.msra.mxu0 %v1029
        %1063 = vmatmul.bf16.gmra.mxu0 %v1043
        %v1064 = vpop.f32.mrf.mxu0
        %v1065 = vadd.f32 0.0, %v1064
        %v1066 = vpop.f32.mrf.mxu0
        %1067 = vdwg.mxu0
        %1068 = vmatpush.bf16.msra.mxu0 0
        %1069 = vmatpush.bf16.msra.mxu0 0
        %1070 = vmatpush.bf16.msra.mxu0 0
        %1071 = vmatpush.bf16.msra.mxu0 0
        %1072 = vmatpush.bf16.msra.mxu0 0
        %1073 = vmatpush.bf16.msra.mxu0 %v1050
        %1074 = vmatpush.bf16.msra.mxu0 %v1032
        %1075 = vmatpush.bf16.msra.mxu0 %v1030
        %1076 = vmatmul.bf16.gmra.mxu0 %v1043
        %v1077 = vpop.f32.mrf.mxu0
        %v1078 = vadd.f32 0.0, %v1077
        %v1079 = vpop.f32.mrf.mxu0
        %1080 = vdwg.mxu0
        %1081 = vmatpush.bf16.msra.mxu0 0
        %1082 = vmatpush.bf16.msra.mxu0 0
        %1083 = vmatpush.bf16.msra.mxu0 0
        %1084 = vmatpush.bf16.msra.mxu0 0
        %1085 = vmatpush.bf16.msra.mxu0 0
        %1086 = vmatpush.bf16.msra.mxu0 %v1053
        %1087 = vmatpush.bf16.msra.mxu0 %v1022
        %1088 = vmatpush.bf16.msra.mxu0 %v1016
        %1089 = vmatmul.bf16.gmra.mxu0 %v1043
        %v1090 = vpop.f32.mrf.mxu0
        %v1091 = vadd.f32 0.0, %v1090
        %v1092 = vpop.f32.mrf.mxu0
        %1093 = vdwg.mxu0
        %v1101 = vsel %vm1041, %v964, 0
        %v1104 = vsel %vm1045, %v1008, 0
        %v1107 = vsel %vm1045, %v1009, 0
        %v1110 = vsel %vm1045, %v1010, 0
        %1112 = vmatpush.bf16.msra.mxu0 0
        %1113 = vmatpush.bf16.msra.mxu0 0
        %1114 = vmatpush.bf16.msra.mxu0 0
        %1115 = vmatpush.bf16.msra.mxu0 0
        %1116 = vmatpush.bf16.msra.mxu0 0
        %1117 = vmatpush.bf16.msra.mxu0 %v1104
        %1118 = vmatpush.bf16.msra.mxu0 %v1005
        %1119 = vmatpush.bf16.msra.mxu0 %v1002
        %1120 = vmatmul.bf16.gmra.mxu0 %v1101
        %v1121 = vpop.f32.mrf.mxu0
        %v1122 = vadd.f32 %v1065, %v1121
        %v1123 = vpop.f32.mrf.mxu0
        %1124 = vdwg.mxu0
        %1125 = vmatpush.bf16.msra.mxu0 0
        %1126 = vmatpush.bf16.msra.mxu0 0
        %1127 = vmatpush.bf16.msra.mxu0 0
        %1128 = vmatpush.bf16.msra.mxu0 0
        %1129 = vmatpush.bf16.msra.mxu0 0
        %1130 = vmatpush.bf16.msra.mxu0 %v1107
        %1131 = vmatpush.bf16.msra.mxu0 %v1006
        %1132 = vmatpush.bf16.msra.mxu0 %v1003
        %1133 = vmatmul.bf16.gmra.mxu0 %v1101
        %v1134 = vpop.f32.mrf.mxu0
        %v1135 = vadd.f32 %v1078, %v1134
        %v1136 = vpop.f32.mrf.mxu0
        %1137 = vdwg.mxu0
        %1138 = vmatpush.bf16.msra.mxu0 0
        %1139 = vmatpush.bf16.msra.mxu0 0
        %1140 = vmatpush.bf16.msra.mxu0 0
        %1141 = vmatpush.bf16.msra.mxu0 0
        %1142 = vmatpush.bf16.msra.mxu0 0
        %1143 = vmatpush.bf16.msra.mxu0 %v1110
        %1144 = vmatpush.bf16.msra.mxu0 %v1007
        %1145 = vmatpush.bf16.msra.mxu0 %v1004
        %1146 = vmatmul.bf16.gmra.mxu0 %v1101
        %v1147 = vpop.f32.mrf.mxu0
        %v1148 = vadd.f32 %v1091, %v1147
        %v1149 = vpop.f32.mrf.mxu0
        %1150 = vdwg.mxu0
        %s1151 = scalar_lea.vmem [#allocation10], 8
        %v1152 = vld [vmem:[%s1151] sm:$0xf]
        %1153 = vrot.lane.b32.xlu0 %v1002, 126
        %v1154 = vpop.permute.xlu0 %1153
        %1155 = vrot.lane.b32.xlu0 %v1003, 126
        %v1156 = vpop.permute.xlu0 %1155
        %1157 = vrot.lane.b32.xlu0 %v1004, 126
        %v1158 = vpop.permute.xlu0 %1157
        %1159 = vrot.lane.b32.xlu0 %v1005, 126
        %v1160 = vpop.permute.xlu0 %1159
        %1161 = vrot.lane.b32.xlu0 %v1006, 126
        %v1162 = vpop.permute.xlu0 %1161
        %1163 = vrot.lane.b32.xlu0 %v1007, 126
        %v1164 = vpop.permute.xlu0 %1163
        %1165 = vrot.lane.b32.xlu0 %v1008, 126
        %v1166 = vpop.permute.xlu0 %1165
        %1167 = vrot.lane.b32.xlu0 %v1009, 126
        %v1168 = vpop.permute.xlu0 %1167
        %1169 = vrot.lane.b32.xlu0 %v1010, 126
        %v1170 = vpop.permute.xlu0 %1169
        %v1171 = vsel %vm652, %v1154, %v1156
        %v1172 = vsel %vm652, %v1156, %v1158
        %v1173 = vsel %vm652, %v1160, %v1162
        %v1174 = vsel %vm652, %v1162, %v1164
        %v1175 = vsel %vm652, %v1166, %v1168
        %v1176 = vsel %vm652, %v1168, %v1170
        %v1184 = vsel %vm1041, %v1152, 0
        %v1187 = vsel %vm1045, %v1175, 0
        %v1190 = vsel %vm1045, %v1176, 0
        %v1193 = vsel %vm1045, %v1170, 0
        %1195 = vmatpush.bf16.msra.mxu0 0
        %1196 = vmatpush.bf16.msra.mxu0 0
        %1197 = vmatpush.bf16.msra.mxu0 0
        %1198 = vmatpush.bf16.msra.mxu0 0
        %1199 = vmatpush.bf16.msra.mxu0 0
        %1200 = vmatpush.bf16.msra.mxu0 %v1187
        %1201 = vmatpush.bf16.msra.mxu0 %v1173
        %1202 = vmatpush.bf16.msra.mxu0 %v1171
        %1203 = vmatmul.bf16.gmra.mxu0 %v1184
        %v1204 = vpop.f32.mrf.mxu0
        %v1205 = vadd.f32 0.0, %v1204
        %v1206 = vpop.f32.mrf.mxu0
        %1207 = vdwg.mxu0
        %1208 = vmatpush.bf16.msra.mxu0 0
        %1209 = vmatpush.bf16.msra.mxu0 0
        %1210 = vmatpush.bf16.msra.mxu0 0
        %1211 = vmatpush.bf16.msra.mxu0 0
        %1212 = vmatpush.bf16.msra.mxu0 0
        %1213 = vmatpush.bf16.msra.mxu0 %v1190
        %1214 = vmatpush.bf16.msra.mxu0 %v1174
        %1215 = vmatpush.bf16.msra.mxu0 %v1172
        %1216 = vmatmul.bf16.gmra.mxu0 %v1184
        %v1217 = vpop.f32.mrf.mxu0
        %v1218 = vadd.f32 0.0, %v1217
        %v1219 = vpop.f32.mrf.mxu0
        %1220 = vdwg.mxu0
        %1221 = vmatpush.bf16.msra.mxu0 0
        %1222 = vmatpush.bf16.msra.mxu0 0
        %1223 = vmatpush.bf16.msra.mxu0 0
        %1224 = vmatpush.bf16.msra.mxu0 0
        %1225 = vmatpush.bf16.msra.mxu0 0
        %1226 = vmatpush.bf16.msra.mxu0 %v1193
        %1227 = vmatpush.bf16.msra.mxu0 %v1164
        %1228 = vmatpush.bf16.msra.mxu0 %v1158
        %1229 = vmatmul.bf16.gmra.mxu0 %v1184
        %v1230 = vpop.f32.mrf.mxu0
        %v1231 = vadd.f32 0.0, %v1230
        %v1232 = vpop.f32.mrf.mxu0
        %1233 = vdwg.mxu0
        %v1234 = vadd.f32 %v1122, %v1205
        %v1235 = vadd.f32 %v1135, %v1218
        %v1236 = vadd.f32 %v1148, %v1231
        %s1237 = scalar_lea.vmem [#allocation10], 12
        %v1238 = vld [vmem:[%s1237] sm:$0xf]
        %1239 = vrot.lane.b32.xlu0 %v1002, 125
        %v1240 = vpop.permute.xlu0 %1239
        %1241 = vrot.lane.b32.xlu0 %v1003, 125
        %v1242 = vpop.permute.xlu0 %1241
        %1243 = vrot.lane.b32.xlu0 %v1004, 125
        %v1244 = vpop.permute.xlu0 %1243
        %1245 = vrot.lane.b32.xlu0 %v1005, 125
        %v1246 = vpop.permute.xlu0 %1245
        %1247 = vrot.lane.b32.xlu0 %v1006, 125
        %v1248 = vpop.permute.xlu0 %1247
        %1249 = vrot.lane.b32.xlu0 %v1007, 125
        %v1250 = vpop.permute.xlu0 %1249
        %1251 = vrot.lane.b32.xlu0 %v1008, 125
        %v1252 = vpop.permute.xlu0 %1251
        %1253 = vrot.lane.b32.xlu0 %v1009, 125
        %v1254 = vpop.permute.xlu0 %1253
        %1255 = vrot.lane.b32.xlu0 %v1010, 125
        %v1256 = vpop.permute.xlu0 %1255
        %v1257 = vsel %vm728, %v1240, %v1242
        %v1258 = vsel %vm728, %v1242, %v1244
        %v1259 = vsel %vm728, %v1246, %v1248
        %v1260 = vsel %vm728, %v1248, %v1250
        %v1261 = vsel %vm728, %v1252, %v1254
        %v1262 = vsel %vm728, %v1254, %v1256
        %v1270 = vsel %vm1041, %v1238, 0
        %v1273 = vsel %vm1045, %v1261, 0
        %v1276 = vsel %vm1045, %v1262, 0
        %v1279 = vsel %vm1045, %v1256, 0
        %1281 = vmatpush.bf16.msra.mxu0 0
        %1282 = vmatpush.bf16.msra.mxu0 0
        %1283 = vmatpush.bf16.msra.mxu0 0
        %1284 = vmatpush.bf16.msra.mxu0 0
        %1285 = vmatpush.bf16.msra.mxu0 0
        %1286 = vmatpush.bf16.msra.mxu0 %v1273
        %1287 = vmatpush.bf16.msra.mxu0 %v1259
        %1288 = vmatpush.bf16.msra.mxu0 %v1257
        %1289 = vmatmul.bf16.gmra.mxu0 %v1270
        %v1290 = vpop.f32.mrf.mxu0
        %v1291 = vadd.f32 0.0, %v1290
        %v1292 = vpop.f32.mrf.mxu0
        %1293 = vdwg.mxu0
        %1294 = vmatpush.bf16.msra.mxu0 0
        %1295 = vmatpush.bf16.msra.mxu0 0
        %1296 = vmatpush.bf16.msra.mxu0 0
        %1297 = vmatpush.bf16.msra.mxu0 0
        %1298 = vmatpush.bf16.msra.mxu0 0
        %1299 = vmatpush.bf16.msra.mxu0 %v1276
        %1300 = vmatpush.bf16.msra.mxu0 %v1260
        %1301 = vmatpush.bf16.msra.mxu0 %v1258
        %1302 = vmatmul.bf16.gmra.mxu0 %v1270
        %v1303 = vpop.f32.mrf.mxu0
        %v1304 = vadd.f32 0.0, %v1303
        %v1305 = vpop.f32.mrf.mxu0
        %1306 = vdwg.mxu0
        %1307 = vmatpush.bf16.msra.mxu0 0
        %1308 = vmatpush.bf16.msra.mxu0 0
        %1309 = vmatpush.bf16.msra.mxu0 0
        %1310 = vmatpush.bf16.msra.mxu0 0
        %1311 = vmatpush.bf16.msra.mxu0 0
        %1312 = vmatpush.bf16.msra.mxu0 %v1279
        %1313 = vmatpush.bf16.msra.mxu0 %v1250
        %1314 = vmatpush.bf16.msra.mxu0 %v1244
        %1315 = vmatmul.bf16.gmra.mxu0 %v1270
        %v1316 = vpop.f32.mrf.mxu0
        %v1317 = vadd.f32 0.0, %v1316
        %v1318 = vpop.f32.mrf.mxu0
        %1319 = vdwg.mxu0
        %v1320 = vadd.f32 %v1234, %v1291
        %v1321 = vadd.f32 %v1235, %v1304
        %v1322 = vadd.f32 %v1236, %v1317
        %s1323 = scalar_lea.vmem [#allocation10], 16
        %v1324 = vld [vmem:[%s1323] sm:$0xf]
        %1325 = vrot.lane.b32.xlu0 %v1002, 124
        %v1326 = vpop.permute.xlu0 %1325
        %1327 = vrot.lane.b32.xlu0 %v1003, 124
        %v1328 = vpop.permute.xlu0 %1327
        %1329 = vrot.lane.b32.xlu0 %v1004, 124
        %v1330 = vpop.permute.xlu0 %1329
        %1331 = vrot.lane.b32.xlu0 %v1005, 124
        %v1332 = vpop.permute.xlu0 %1331
        %1333 = vrot.lane.b32.xlu0 %v1006, 124
        %v1334 = vpop.permute.xlu0 %1333
        %1335 = vrot.lane.b32.xlu0 %v1007, 124
        %v1336 = vpop.permute.xlu0 %1335
        %1337 = vrot.lane.b32.xlu0 %v1008, 124
        %v1338 = vpop.permute.xlu0 %1337
        %1339 = vrot.lane.b32.xlu0 %v1009, 124
        %v1340 = vpop.permute.xlu0 %1339
        %1341 = vrot.lane.b32.xlu0 %v1010, 124
        %v1342 = vpop.permute.xlu0 %1341
        %v1343 = vsel %vm804, %v1326, %v1328
        %v1344 = vsel %vm804, %v1328, %v1330
        %v1345 = vsel %vm804, %v1332, %v1334
        %v1346 = vsel %vm804, %v1334, %v1336
        %v1347 = vsel %vm804, %v1338, %v1340
        %v1348 = vsel %vm804, %v1340, %v1342
        %v1356 = vsel %vm1041, %v1324, 0
        %v1359 = vsel %vm1045, %v1347, 0
        %v1362 = vsel %vm1045, %v1348, 0
        %v1365 = vsel %vm1045, %v1342, 0
        %1367 = vmatpush.bf16.msra.mxu0 0
        %1368 = vmatpush.bf16.msra.mxu0 0
        %1369 = vmatpush.bf16.msra.mxu0 0
        %1370 = vmatpush.bf16.msra.mxu0 0
        %1371 = vmatpush.bf16.msra.mxu0 0
        %1372 = vmatpush.bf16.msra.mxu0 %v1359
        %1373 = vmatpush.bf16.msra.mxu0 %v1345
        %1374 = vmatpush.bf16.msra.mxu0 %v1343
        %1375 = vmatmul.bf16.gmra.mxu0 %v1356
        %v1376 = vpop.f32.mrf.mxu0
        %v1377 = vadd.f32 0.0, %v1376
        %v1378 = vpop.f32.mrf.mxu0
        %1379 = vdwg.mxu0
        %1380 = vmatpush.bf16.msra.mxu0 0
        %1381 = vmatpush.bf16.msra.mxu0 0
        %1382 = vmatpush.bf16.msra.mxu0 0
        %1383 = vmatpush.bf16.msra.mxu0 0
        %1384 = vmatpush.bf16.msra.mxu0 0
        %1385 = vmatpush.bf16.msra.mxu0 %v1362
        %1386 = vmatpush.bf16.msra.mxu0 %v1346
        %1387 = vmatpush.bf16.msra.mxu0 %v1344
        %1388 = vmatmul.bf16.gmra.mxu0 %v1356
        %v1389 = vpop.f32.mrf.mxu0
        %v1390 = vadd.f32 0.0, %v1389
        %v1391 = vpop.f32.mrf.mxu0
        %1392 = vdwg.mxu0
        %1393 = vmatpush.bf16.msra.mxu0 0
        %1394 = vmatpush.bf16.msra.mxu0 0
        %1395 = vmatpush.bf16.msra.mxu0 0
        %1396 = vmatpush.bf16.msra.mxu0 0
        %1397 = vmatpush.bf16.msra.mxu0 0
        %1398 = vmatpush.bf16.msra.mxu0 %v1365
        %1399 = vmatpush.bf16.msra.mxu0 %v1336
        %1400 = vmatpush.bf16.msra.mxu0 %v1330
        %1401 = vmatmul.bf16.gmra.mxu0 %v1356
        %v1402 = vpop.f32.mrf.mxu0
        %v1403 = vadd.f32 0.0, %v1402
        %v1404 = vpop.f32.mrf.mxu0
        %1405 = vdwg.mxu0
        %v1406 = vadd.f32 %v1320, %v1377
        %v1407 = vadd.f32 %v1321, %v1390
        %v1408 = vadd.f32 %v1322, %v1403
        %v1409 = vsel %vm869, %v1406, 0.0
        %v1410 = vsel %vm870, %v1407, 0.0
        %v1411 = vsel %vm871, %v1408, 0.0
        %v1412 = vpack.c.bf16 %v1410, %v1409
        %v1413 = vpack.c.bf16 %v1411, %v1411
        %1414 = vst [vmem:[#allocation3 + $0x4] sm:$0xff] %v1412
        %1415 = vst.msk [vmem:[#allocation3 + $0xc] sm:$0xf] %vm878, %v1413
        %v1416 = vld [vmem:[#allocation3] sm:$0xff]
        %v1417 = vld [vmem:[#allocation3 + $0x8] sm:$0xff]
        %1420 = vrot.lane.b32.xlu0 %v1416, 42
        %v1421 = vpop.permute.xlu0 %1420
        %1422 = vrot.lane.b32.xlu0 %v1417, 42
        %v1423 = vpop.permute.xlu0 %1422
        %v1424 = vrot.slane %v1421, 4
        %v1425 = vrot.slane %v1423, 4
        %v1426 = vsel %vm394, %v1424, %v1425
        %v1427 = vsel %vm396, %v1421, %v1426
        %v1428 = vsel %vm396, %v1423, %v1425
        %1431 = vst [vmem:[#allocation4] sm:$0xff] %v1427
        %1432 = vst.msk [vmem:[#allocation4 + $0x8] sm:$0xf] %vm896, %v1428
        %v1433 = vld [vmem:[#allocation3] sm:$0xff]
        %v1434 = vld [vmem:[#allocation3 + $0x8] sm:$0xff]
        %1437 = vrot.lane.b32.xlu0 %v1433, 22
        %v1438 = vpop.permute.xlu0 %1437
        %1439 = vrot.lane.b32.xlu0 %v1434, 22
        %v1440 = vpop.permute.xlu0 %1439
        %v1441 = vrot.slane %v1438, 4
        %v1442 = vrot.slane %v1440, 4
        %v1443 = vsel %vm394, %v1441, %v1442
        %v1444 = vsel %vm417, %v1438, %v1443
        %v1445 = vsel %vm417, %v1440, %v1442
        %1448 = vst [vmem:[#allocation4 + $0xc] sm:$0xff] %v1444
        %1449 = vst.msk [vmem:[#allocation4 + $0x14] sm:$0xf] %vm896, %v1445
        %v1450 = vld [vmem:[#allocation3] sm:$0xff]
        %v1451 = vld [vmem:[#allocation3 + $0x8] sm:$0xff]
        %1454 = vrot.lane.b32.xlu0 %v1450, 2
        %v1455 = vpop.permute.xlu0 %1454
        %1456 = vrot.lane.b32.xlu0 %v1451, 2
        %v1457 = vpop.permute.xlu0 %1456
        %v1458 = vrot.slane %v1455, 4
        %v1459 = vrot.slane %v1457, 4
        %v1460 = vsel %vm394, %v1458, %v1459
        %v1461 = vsel %vm437, %v1455, %v1460
        %v1462 = vsel %vm437, %v1457, %v1459
        %1465 = vst [vmem:[#allocation4 + $0x18] sm:$0xff] %v1461
        %1466 = vst.msk [vmem:[#allocation4 + $0x20] sm:$0xf] %vm896, %v1462
        %v1467 = vld [vmem:[#allocation3 + $0x4] sm:$0xff]
        %v1468 = vld [vmem:[#allocation3 + $0xc] sm:$0xf]
        %1471 = vrot.lane.b32.xlu0 %v1467, 110
        %v1472 = vpop.permute.xlu0 %1471
        %1473 = vrot.lane.b32.xlu0 %v1468, 110
        %v1474 = vpop.permute.xlu0 %1473
        %v1475 = vrot.slane %v1472, 4
        %v1476 = vrot.slane %v1474, 4
        %v1477 = vsel %vm394, %v1475, %v1476
        %v1478 = vsel %vm457, %v1472, %v1477
        %1481 = vst [vmem:[#allocation4 + $0x24] sm:$0xff] %v1478
        %1482 = vst.msk [vmem:[#allocation4 + $0x2c] sm:$0xf] %vm896, %v1474
        %v1483 = vld [vmem:[#allocation3 + $0x4] sm:$0xff]
        %v1484 = vld [vmem:[#allocation3 + $0xc] sm:$0xf]
        %1487 = vrot.lane.b32.xlu0 %v1483, 90
        %v1488 = vpop.permute.xlu0 %1487
        %1489 = vrot.lane.b32.xlu0 %v1484, 90
        %v1490 = vpop.permute.xlu0 %1489
        %v1491 = vrot.slane %v1488, 4
        %v1492 = vrot.slane %v1490, 4
        %v1493 = vsel %vm394, %v1491, %v1492
        %v1494 = vsel %vm475, %v1488, %v1493
        %1497 = vst [vmem:[#allocation4 + $0x30] sm:$0xff] %v1494
        %1498 = vst.msk [vmem:[#allocation4 + $0x38] sm:$0xf] %vm896, %v1490
        %v1499 = vld [vmem:[#allocation11] sm:$0xf]
        %v1500 = vld [vmem:[#allocation4] sm:$0xff]
        %v1501 = vld [vmem:[#allocation4 + $0x8] sm:$0xf]
        %v1502 = vld [vmem:[#allocation4 + $0xc] sm:$0xff]
        %v1503 = vld [vmem:[#allocation4 + $0x14] sm:$0xf]
        %v1504 = vld [vmem:[#allocation4 + $0x18] sm:$0xff]
        %v1505 = vld [vmem:[#allocation4 + $0x20] sm:$0xf]
        %v1506 = vld [vmem:[#allocation4 + $0x24] sm:$0xff]
        %v1507 = vld [vmem:[#allocation4 + $0x2c] sm:$0xf]
        %v1508 = vld [vmem:[#allocation4 + $0x30] sm:$0xff]
        %v1509 = vld [vmem:[#allocation4 + $0x38] sm:$0xf]
        %s1510 = scalar_lea.vmem [#allocation11], 4
        %v1511 = vld [vmem:[%s1510] sm:$0xf]
        %v1522 = vunpack.c.l.b16 %v1500
        %v1523 = vunpack.c.h.b16 %v1500
        %v1524 = vunpack.c.l.b16 %v1501
        %v1525 = vunpack.c.l.b16 %v1502
        %v1526 = vunpack.c.h.b16 %v1502
        %v1527 = vunpack.c.l.b16 %v1503
        %v1528 = vunpack.c.l.b16 %v1504
        %v1529 = vunpack.c.h.b16 %v1504
        %v1530 = vunpack.c.l.b16 %v1505
        %v1531 = vunpack.c.l.b16 %v1506
        %v1532 = vunpack.c.h.b16 %v1506
        %v1533 = vunpack.c.l.b16 %v1507
        %v1534 = vunpack.c.l.b16 %v1508
        %v1535 = vunpack.c.h.b16 %v1508
        %v1536 = vunpack.c.l.b16 %v1509
        %v1537 = vpack.c.b16 %v1525, %v1522
        %v1538 = vpack.c.b16 %v1526, %v1523
        %v1539 = vpack.c.b16 %v1527, %v1524
        %v1540 = vpack.c.b16 %v1531, %v1528
        %v1541 = vpack.c.b16 %v1532, %v1529
        %v1542 = vpack.c.b16 %v1533, %v1530
        %v1543 = vpack.c.b16 %v1534, %v1534
        %v1544 = vpack.c.b16 %v1535, %v1535
        %v1545 = vpack.c.b16 %v1536, %v1536
        %1546 = vrot.lane.b32.xlu0 %v1537, 127
        %v1547 = vpop.permute.xlu0 %1546
        %1548 = vrot.lane.b32.xlu0 %v1538, 127
        %v1549 = vpop.permute.xlu0 %1548
        %1550 = vrot.lane.b32.xlu0 %v1539, 127
        %v1551 = vpop.permute.xlu0 %1550
        %1552 = vrot.lane.b32.xlu0 %v1540, 127
        %v1553 = vpop.permute.xlu0 %1552
        %1554 = vrot.lane.b32.xlu0 %v1541, 127
        %v1555 = vpop.permute.xlu0 %1554
        %1556 = vrot.lane.b32.xlu0 %v1542, 127
        %v1557 = vpop.permute.xlu0 %1556
        %1558 = vrot.lane.b32.xlu0 %v1543, 127
        %v1559 = vpop.permute.xlu0 %1558
        %1560 = vrot.lane.b32.xlu0 %v1544, 127
        %v1561 = vpop.permute.xlu0 %1560
        %1562 = vrot.lane.b32.xlu0 %v1545, 127
        %v1563 = vpop.permute.xlu0 %1562
        %v1564 = vsel %vm523, %v1547, %v1549
        %v1565 = vsel %vm523, %v1549, %v1551
        %v1566 = vsel %vm523, %v1553, %v1555
        %v1567 = vsel %vm523, %v1555, %v1557
        %v1568 = vsel %vm523, %v1559, %v1561
        %v1569 = vsel %vm523, %v1561, %v1563
        %v1577 = vsel %vm1041, %v1511, 0
        %v1580 = vsel %vm1045, %v1568, 0
        %v1583 = vsel %vm1045, %v1569, 0
        %v1586 = vsel %vm1045, %v1563, 0
        %1588 = vmatpush.bf16.msra.mxu0 0
        %1589 = vmatpush.bf16.msra.mxu0 0
        %1590 = vmatpush.bf16.msra.mxu0 0
        %1591 = vmatpush.bf16.msra.mxu0 0
        %1592 = vmatpush.bf16.msra.mxu0 0
        %1593 = vmatpush.bf16.msra.mxu0 %v1580
        %1594 = vmatpush.bf16.msra.mxu0 %v1566
        %1595 = vmatpush.bf16.msra.mxu0 %v1564
        %1596 = vmatmul.bf16.gmra.mxu0 %v1577
        %v1597 = vpop.f32.mrf.mxu0
        %v1598 = vadd.f32 0.0, %v1597
        %v1599 = vpop.f32.mrf.mxu0
        %1600 = vdwg.mxu0
        %1601 = vmatpush.bf16.msra.mxu0 0
        %1602 = vmatpush.bf16.msra.mxu0 0
        %1603 = vmatpush.bf16.msra.mxu0 0
        %1604 = vmatpush.bf16.msra.mxu0 0
        %1605 = vmatpush.bf16.msra.mxu0 0
        %1606 = vmatpush.bf16.msra.mxu0 %v1583
        %1607 = vmatpush.bf16.msra.mxu0 %v1567
        %1608 = vmatpush.bf16.msra.mxu0 %v1565
        %1609 = vmatmul.bf16.gmra.mxu0 %v1577
        %v1610 = vpop.f32.mrf.mxu0
        %v1611 = vadd.f32 0.0, %v1610
        %v1612 = vpop.f32.mrf.mxu0
        %1613 = vdwg.mxu0
        %1614 = vmatpush.bf16.msra.mxu0 0
        %1615 = vmatpush.bf16.msra.mxu0 0
        %1616 = vmatpush.bf16.msra.mxu0 0
        %1617 = vmatpush.bf16.msra.mxu0 0
        %1618 = vmatpush.bf16.msra.mxu0 0
        %1619 = vmatpush.bf16.msra.mxu0 %v1586
        %1620 = vmatpush.bf16.msra.mxu0 %v1557
        %1621 = vmatpush.bf16.msra.mxu0 %v1551
        %1622 = vmatmul.bf16.gmra.mxu0 %v1577
        %v1623 = vpop.f32.mrf.mxu0
        %v1624 = vadd.f32 0.0, %v1623
        %v1625 = vpop.f32.mrf.mxu0
        %1626 = vdwg.mxu0
        %v1634 = vsel %vm1041, %v1499, 0
        %v1637 = vsel %vm1045, %v1543, 0
        %v1640 = vsel %vm1045, %v1544, 0
        %v1643 = vsel %vm1045, %v1545, 0
        %1645 = vmatpush.bf16.msra.mxu0 0
        %1646 = vmatpush.bf16.msra.mxu0 0
        %1647 = vmatpush.bf16.msra.mxu0 0
        %1648 = vmatpush.bf16.msra.mxu0 0
        %1649 = vmatpush.bf16.msra.mxu0 0
        %1650 = vmatpush.bf16.msra.mxu0 %v1637
        %1651 = vmatpush.bf16.msra.mxu0 %v1540
        %1652 = vmatpush.bf16.msra.mxu0 %v1537
        %1653 = vmatmul.bf16.gmra.mxu0 %v1634
        %v1654 = vpop.f32.mrf.mxu0
        %v1655 = vadd.f32 %v1598, %v1654
        %v1656 = vpop.f32.mrf.mxu0
        %1657 = vdwg.mxu0
        %1658 = vmatpush.bf16.msra.mxu0 0
        %1659 = vmatpush.bf16.msra.mxu0 0
        %1660 = vmatpush.bf16.msra.mxu0 0
        %1661 = vmatpush.bf16.msra.mxu0 0
        %1662 = vmatpush.bf16.msra.mxu0 0
        %1663 = vmatpush.bf16.msra.mxu0 %v1640
        %1664 = vmatpush.bf16.msra.mxu0 %v1541
        %1665 = vmatpush.bf16.msra.mxu0 %v1538
        %1666 = vmatmul.bf16.gmra.mxu0 %v1634
        %v1667 = vpop.f32.mrf.mxu0
        %v1668 = vadd.f32 %v1611, %v1667
        %v1669 = vpop.f32.mrf.mxu0
        %1670 = vdwg.mxu0
        %1671 = vmatpush.bf16.msra.mxu0 0
        %1672 = vmatpush.bf16.msra.mxu0 0
        %1673 = vmatpush.bf16.msra.mxu0 0
        %1674 = vmatpush.bf16.msra.mxu0 0
        %1675 = vmatpush.bf16.msra.mxu0 0
        %1676 = vmatpush.bf16.msra.mxu0 %v1643
        %1677 = vmatpush.bf16.msra.mxu0 %v1542
        %1678 = vmatpush.bf16.msra.mxu0 %v1539
        %1679 = vmatmul.bf16.gmra.mxu0 %v1634
        %v1680 = vpop.f32.mrf.mxu0
        %v1681 = vadd.f32 %v1624, %v1680
        %v1682 = vpop.f32.mrf.mxu0
        %1683 = vdwg.mxu0
        %s1684 = scalar_lea.vmem [#allocation11], 8
        %v1685 = vld [vmem:[%s1684] sm:$0xf]
        %1686 = vrot.lane.b32.xlu0 %v1537, 126
        %v1687 = vpop.permute.xlu0 %1686
        %1688 = vrot.lane.b32.xlu0 %v1538, 126
        %v1689 = vpop.permute.xlu0 %1688
        %1690 = vrot.lane.b32.xlu0 %v1539, 126
        %v1691 = vpop.permute.xlu0 %1690
        %1692 = vrot.lane.b32.xlu0 %v1540, 126
        %v1693 = vpop.permute.xlu0 %1692
        %1694 = vrot.lane.b32.xlu0 %v1541, 126
        %v1695 = vpop.permute.xlu0 %1694
        %1696 = vrot.lane.b32.xlu0 %v1542, 126
        %v1697 = vpop.permute.xlu0 %1696
        %1698 = vrot.lane.b32.xlu0 %v1543, 126
        %v1699 = vpop.permute.xlu0 %1698
        %1700 = vrot.lane.b32.xlu0 %v1544, 126
        %v1701 = vpop.permute.xlu0 %1700
        %1702 = vrot.lane.b32.xlu0 %v1545, 126
        %v1703 = vpop.permute.xlu0 %1702
        %v1704 = vsel %vm652, %v1687, %v1689
        %v1705 = vsel %vm652, %v1689, %v1691
        %v1706 = vsel %vm652, %v1693, %v1695
        %v1707 = vsel %vm652, %v1695, %v1697
        %v1708 = vsel %vm652, %v1699, %v1701
        %v1709 = vsel %vm652, %v1701, %v1703
        %v1717 = vsel %vm1041, %v1685, 0
        %v1720 = vsel %vm1045, %v1708, 0
        %v1723 = vsel %vm1045, %v1709, 0
        %v1726 = vsel %vm1045, %v1703, 0
        %1728 = vmatpush.bf16.msra.mxu0 0
        %1729 = vmatpush.bf16.msra.mxu0 0
        %1730 = vmatpush.bf16.msra.mxu0 0
        %1731 = vmatpush.bf16.msra.mxu0 0
        %1732 = vmatpush.bf16.msra.mxu0 0
        %1733 = vmatpush.bf16.msra.mxu0 %v1720
        %1734 = vmatpush.bf16.msra.mxu0 %v1706
        %1735 = vmatpush.bf16.msra.mxu0 %v1704
        %1736 = vmatmul.bf16.gmra.mxu0 %v1717
        %v1737 = vpop.f32.mrf.mxu0
        %v1738 = vadd.f32 0.0, %v1737
        %v1739 = vpop.f32.mrf.mxu0
        %1740 = vdwg.mxu0
        %1741 = vmatpush.bf16.msra.mxu0 0
        %1742 = vmatpush.bf16.msra.mxu0 0
        %1743 = vmatpush.bf16.msra.mxu0 0
        %1744 = vmatpush.bf16.msra.mxu0 0
        %1745 = vmatpush.bf16.msra.mxu0 0
        %1746 = vmatpush.bf16.msra.mxu0 %v1723
        %1747 = vmatpush.bf16.msra.mxu0 %v1707
        %1748 = vmatpush.bf16.msra.mxu0 %v1705
        %1749 = vmatmul.bf16.gmra.mxu0 %v1717
        %v1750 = vpop.f32.mrf.mxu0
        %v1751 = vadd.f32 0.0, %v1750
        %v1752 = vpop.f32.mrf.mxu0
        %1753 = vdwg.mxu0
        %1754 = vmatpush.bf16.msra.mxu0 0
        %1755 = vmatpush.bf16.msra.mxu0 0
        %1756 = vmatpush.bf16.msra.mxu0 0
        %1757 = vmatpush.bf16.msra.mxu0 0
        %1758 = vmatpush.bf16.msra.mxu0 0
        %1759 = vmatpush.bf16.msra.mxu0 %v1726
        %1760 = vmatpush.bf16.msra.mxu0 %v1697
        %1761 = vmatpush.bf16.msra.mxu0 %v1691
        %1762 = vmatmul.bf16.gmra.mxu0 %v1717
        %v1763 = vpop.f32.mrf.mxu0
        %v1764 = vadd.f32 0.0, %v1763
        %v1765 = vpop.f32.mrf.mxu0
        %1766 = vdwg.mxu0
        %v1767 = vadd.f32 %v1655, %v1738
        %v1768 = vadd.f32 %v1668, %v1751
        %v1769 = vadd.f32 %v1681, %v1764
        %s1770 = scalar_lea.vmem [#allocation11], 12
        %v1771 = vld [vmem:[%s1770] sm:$0xf]
        %1772 = vrot.lane.b32.xlu0 %v1537, 125
        %v1773 = vpop.permute.xlu0 %1772
        %1774 = vrot.lane.b32.xlu0 %v1538, 125
        %v1775 = vpop.permute.xlu0 %1774
        %1776 = vrot.lane.b32.xlu0 %v1539, 125
        %v1777 = vpop.permute.xlu0 %1776
        %1778 = vrot.lane.b32.xlu0 %v1540, 125
        %v1779 = vpop.permute.xlu0 %1778
        %1780 = vrot.lane.b32.xlu0 %v1541, 125
        %v1781 = vpop.permute.xlu0 %1780
        %1782 = vrot.lane.b32.xlu0 %v1542, 125
        %v1783 = vpop.permute.xlu0 %1782
        %1784 = vrot.lane.b32.xlu0 %v1543, 125
        %v1785 = vpop.permute.xlu0 %1784
        %1786 = vrot.lane.b32.xlu0 %v1544, 125
        %v1787 = vpop.permute.xlu0 %1786
        %1788 = vrot.lane.b32.xlu0 %v1545, 125
        %v1789 = vpop.permute.xlu0 %1788
        %v1790 = vsel %vm728, %v1773, %v1775
        %v1791 = vsel %vm728, %v1775, %v1777
        %v1792 = vsel %vm728, %v1779, %v1781
        %v1793 = vsel %vm728, %v1781, %v1783
        %v1794 = vsel %vm728, %v1785, %v1787
        %v1795 = vsel %vm728, %v1787, %v1789
        %v1803 = vsel %vm1041, %v1771, 0
        %v1806 = vsel %vm1045, %v1794, 0
        %v1809 = vsel %vm1045, %v1795, 0
        %v1812 = vsel %vm1045, %v1789, 0
        %1814 = vmatpush.bf16.msra.mxu0 0
        %1815 = vmatpush.bf16.msra.mxu0 0
        %1816 = vmatpush.bf16.msra.mxu0 0
        %1817 = vmatpush.bf16.msra.mxu0 0
        %1818 = vmatpush.bf16.msra.mxu0 0
        %1819 = vmatpush.bf16.msra.mxu0 %v1806
        %1820 = vmatpush.bf16.msra.mxu0 %v1792
        %1821 = vmatpush.bf16.msra.mxu0 %v1790
        %1822 = vmatmul.bf16.gmra.mxu0 %v1803
        %v1823 = vpop.f32.mrf.mxu0
        %v1824 = vadd.f32 0.0, %v1823
        %v1825 = vpop.f32.mrf.mxu0
        %1826 = vdwg.mxu0
        %1827 = vmatpush.bf16.msra.mxu0 0
        %1828 = vmatpush.bf16.msra.mxu0 0
        %1829 = vmatpush.bf16.msra.mxu0 0
        %1830 = vmatpush.bf16.msra.mxu0 0
        %1831 = vmatpush.bf16.msra.mxu0 0
        %1832 = vmatpush.bf16.msra.mxu0 %v1809
        %1833 = vmatpush.bf16.msra.mxu0 %v1793
        %1834 = vmatpush.bf16.msra.mxu0 %v1791
        %1835 = vmatmul.bf16.gmra.mxu0 %v1803
        %v1836 = vpop.f32.mrf.mxu0
        %v1837 = vadd.f32 0.0, %v1836
        %v1838 = vpop.f32.mrf.mxu0
        %1839 = vdwg.mxu0
        %1840 = vmatpush.bf16.msra.mxu0 0
        %1841 = vmatpush.bf16.msra.mxu0 0
        %1842 = vmatpush.bf16.msra.mxu0 0
        %1843 = vmatpush.bf16.msra.mxu0 0
        %1844 = vmatpush.bf16.msra.mxu0 0
        %1845 = vmatpush.bf16.msra.mxu0 %v1812
        %1846 = vmatpush.bf16.msra.mxu0 %v1783
        %1847 = vmatpush.bf16.msra.mxu0 %v1777
        %1848 = vmatmul.bf16.gmra.mxu0 %v1803
        %v1849 = vpop.f32.mrf.mxu0
        %v1850 = vadd.f32 0.0, %v1849
        %v1851 = vpop.f32.mrf.mxu0
        %1852 = vdwg.mxu0
        %v1853 = vadd.f32 %v1767, %v1824
        %v1854 = vadd.f32 %v1768, %v1837
        %v1855 = vadd.f32 %v1769, %v1850
        %s1856 = scalar_lea.vmem [#allocation11], 16
        %v1857 = vld [vmem:[%s1856] sm:$0xf]
        %1858 = vrot.lane.b32.xlu0 %v1537, 124
        %v1859 = vpop.permute.xlu0 %1858
        %1860 = vrot.lane.b32.xlu0 %v1538, 124
        %v1861 = vpop.permute.xlu0 %1860
        %1862 = vrot.lane.b32.xlu0 %v1539, 124
        %v1863 = vpop.permute.xlu0 %1862
        %1864 = vrot.lane.b32.xlu0 %v1540, 124
        %v1865 = vpop.permute.xlu0 %1864
        %1866 = vrot.lane.b32.xlu0 %v1541, 124
        %v1867 = vpop.permute.xlu0 %1866
        %1868 = vrot.lane.b32.xlu0 %v1542, 124
        %v1869 = vpop.permute.xlu0 %1868
        %1870 = vrot.lane.b32.xlu0 %v1543, 124
        %v1871 = vpop.permute.xlu0 %1870
        %1872 = vrot.lane.b32.xlu0 %v1544, 124
        %v1873 = vpop.permute.xlu0 %1872
        %1874 = vrot.lane.b32.xlu0 %v1545, 124
        %v1875 = vpop.permute.xlu0 %1874
        %v1876 = vsel %vm804, %v1859, %v1861
        %v1877 = vsel %vm804, %v1861, %v1863
        %v1878 = vsel %vm804, %v1865, %v1867
        %v1879 = vsel %vm804, %v1867, %v1869
        %v1880 = vsel %vm804, %v1871, %v1873
        %v1881 = vsel %vm804, %v1873, %v1875
        %v1889 = vsel %vm1041, %v1857, 0
        %v1892 = vsel %vm1045, %v1880, 0
        %v1895 = vsel %vm1045, %v1881, 0
        %v1898 = vsel %vm1045, %v1875, 0
        %1900 = vmatpush.bf16.msra.mxu0 0
        %1901 = vmatpush.bf16.msra.mxu0 0
        %1902 = vmatpush.bf16.msra.mxu0 0
        %1903 = vmatpush.bf16.msra.mxu0 0
        %1904 = vmatpush.bf16.msra.mxu0 0
        %1905 = vmatpush.bf16.msra.mxu0 %v1892
        %1906 = vmatpush.bf16.msra.mxu0 %v1878
        %1907 = vmatpush.bf16.msra.mxu0 %v1876
        %1908 = vmatmul.bf16.gmra.mxu0 %v1889
        %v1909 = vpop.f32.mrf.mxu0
        %v1910 = vadd.f32 0.0, %v1909
        %v1911 = vpop.f32.mrf.mxu0
        %1912 = vdwg.mxu0
        %1913 = vmatpush.bf16.msra.mxu0 0
        %1914 = vmatpush.bf16.msra.mxu0 0
        %1915 = vmatpush.bf16.msra.mxu0 0
        %1916 = vmatpush.bf16.msra.mxu0 0
        %1917 = vmatpush.bf16.msra.mxu0 0
        %1918 = vmatpush.bf16.msra.mxu0 %v1895
        %1919 = vmatpush.bf16.msra.mxu0 %v1879
        %1920 = vmatpush.bf16.msra.mxu0 %v1877
        %1921 = vmatmul.bf16.gmra.mxu0 %v1889
        %v1922 = vpop.f32.mrf.mxu0
        %v1923 = vadd.f32 0.0, %v1922
        %v1924 = vpop.f32.mrf.mxu0
        %1925 = vdwg.mxu0
        %1926 = vmatpush.bf16.msra.mxu0 0
        %1927 = vmatpush.bf16.msra.mxu0 0
        %1928 = vmatpush.bf16.msra.mxu0 0
        %1929 = vmatpush.bf16.msra.mxu0 0
        %1930 = vmatpush.bf16.msra.mxu0 0
        %1931 = vmatpush.bf16.msra.mxu0 %v1898
        %1932 = vmatpush.bf16.msra.mxu0 %v1869
        %1933 = vmatpush.bf16.msra.mxu0 %v1863
        %1934 = vmatmul.bf16.gmra.mxu0 %v1889
        %v1935 = vpop.f32.mrf.mxu0
        %v1936 = vadd.f32 0.0, %v1935
        %v1937 = vpop.f32.mrf.mxu0
        %1938 = vdwg.mxu0
        %v1939 = vadd.f32 %v1853, %v1910
        %v1940 = vadd.f32 %v1854, %v1923
        %v1941 = vadd.f32 %v1855, %v1936
        %1942 = vst [vmem:[%s265] sm:$0xff] %v1939
        %1943 = vst [vmem:[%s265 + $0x8] sm:$0xff] %v1940
        %vm1944 = vcmask 523264
        %1945 = vst.msk [vmem:[%s265 + $0x10] sm:$0xff] %vm1944, %v1941
        %s1946 = sand.u32 %s120, 1
        %s1947 = scalar_lea.sflag [#allocation7], %s1946
        %s1948 = sand.u32 %s120, 1
        %s1949 = smul.addr %s1948, 24
        %s1950 = scalar_lea.vmem [#allocation13], %s1949
        // Predicated region
        $region53: #{tpu_custom_call.1} parent=35 // pred_check
          %p1951 = pneg %p130
        $region54: #{tpu_custom_call.1} parent=35 // pred_check_branch
          %1953 = sbr.rel (%p1951) target = $region56
        $region55: #{tpu_custom_call.1} parent=35 // pred_region
          %1955 = vsyncadd %s1947, 0
          %s1956 = smul.addr %s23, 3
          %s1957 = smul.addr %s1956, 8
          %s1958 = scalar_lea.hbm %s4, %s1957
          %s1960 = sshll.u32 %s1950, 4
          %s1961 = int_to_ptr.vmem [resolvable:$true] %s1960
          %s1962 = sshll.u32 %s1958, 4
          %s1963 = int_to_ptr.hbm [resolvable:$true] %s1962
          %1965 = dma.vmem_to_hbm [thread:$0]  %s1961, 384, %s1963, %s1947
        $region56: #{tpu_custom_call.1} parent=35 // pred_fallthru
          _
      $region36: #{tpu_custom_call.1} parent=5 // pred_fallthru
        _
      %p1966 = scmp.le.s32.totalorder 2, %s18
      // Predicated region
      $region57: #{tpu_custom_call.1} parent=5 // pred_check
        %p1967 = pneg %p1966
      $region58: #{tpu_custom_call.1} parent=5 // pred_check_branch
        %1969 = sbr.rel (%p1967) target = $region60
      $region59: #{tpu_custom_call.1} parent=5 // pred_region
        %s1970 = ssub.s32 %s18, 2
        // Predicated region
        $region61: #{tpu_custom_call.1} parent=59 // pred_check
          %p1971 = pneg %p136
        $region62: #{tpu_custom_call.1} parent=59 // pred_check_branch
          %1973 = sbr.rel (%p1971) target = $region64
        $region63: #{tpu_custom_call.1} parent=59 // pred_region
          %s1974 = sand.u32 %s121, 1
          %s1975 = scalar_lea.sflag [#allocation7], %s1974
          %s1976 = sand.u32 %s121, 1
          %s1977 = smul.addr %s1976, 24
          %s1978 = scalar_lea.vmem [#allocation13], %s1977
          %1980 = dma.done %s1975, 384
        $region64: #{tpu_custom_call.1} parent=59 // pred_fallthru
          _
      $region60: #{tpu_custom_call.1} parent=5 // pred_fallthru
        _
    $region6: #{tpu_custom_call.1} parent=1 // loop_footer
      %s22 = sadd.s32 1, %s18
    $region7: #{tpu_custom_call.1} parent=1 // loop_footer_branch
      %17 = sbr.rel target = $region3
    $region8: #{tpu_custom_call.1} parent=1 // loop_exit
      _
    %1981 = vsyncpa [#allocation6], 1
    %s1982 = scalar_lea.sflag [#allocation6], 1
    %1983 = vsyncpa %s1982, 1
    %1984 = vsyncpa [#allocation9], 1
    %1985 = vsyncpa [#allocation12], 1
    %1986 = vsyncpa [#allocation7], 1
    %s1987 = scalar_lea.sflag [#allocation7], 1
    %1988 = vsyncpa %s1987, 1

</llo_original>
